<compile_context>
chip_gen: v5e
topology: v5e:2x2
jax: 0.10.0
libtpu: 0.0.40
codegen_flags: <defaults>
</compile_context>

<pallas_src>
import functools

import jax
import jax.numpy as jnp
from jax.experimental import pallas as pl
from jax.experimental.pallas import tpu as pltpu

NUM_ATOM_TYPE = 120
NUM_CHIRALITY_TAG = 3
NUM_BOND_TYPE = 6
NUM_BOND_DIRECTION = 3

EMB_DIM = 32        # emb_dim (small; module default 300)
FEAT_DIM = 64       # feat_dim (small; module default 256)
NUM_LAYER = 2       # num_layer >= 2
OUTPUT_DIM = 2      # classification: output_dim(=1) * 2
BN_EPS = 1e-5

LANE = 128                          # lane-padded width of every matmul operand
GP = 8                              # graph axis padded to a sublane multiple
CHIR_BASE = NUM_ATOM_TYPE           # chirality rows start here in the node table
BOND_DIR_BASE = NUM_BOND_TYPE       # bond-direction rows start here in edge table
EDGE_TBL_ROWS = 16                  # 6 bond types + 3 directions, padded to 16

# ---- static row offsets inside the single bf16 weight slab --------------------
NODE_TBL_OFF = 0
_off = LANE
EDGE_OFF, W1_OFF, W2_OFF = [], [], []
for _ in range(NUM_LAYER):
    EDGE_OFF.append(_off); _off += EDGE_TBL_ROWS
    W1_OFF.append(_off);   _off += LANE
    W2_OFF.append(_off);   _off += LANE
WF_OFF = _off;  _off += LANE
WP1_OFF = _off; _off += LANE
WP2_OFF = _off; _off += LANE
W_SLAB_ROWS = _off

# ---- static row offsets inside the single f32 bias / BN slab ------------------
def _b1(l): return 4 * l
def _b2(l): return 4 * l + 1
def _gamma(l): return 4 * l + 2
def _beta(l): return 4 * l + 3
BF_ROW = 4 * NUM_LAYER
BP1_ROW = BF_ROW + 1
BP2_ROW = BF_ROW + 2
B_SLAB_ROWS = 16


def _pad2(a, rows, cols):
    r, c = a.shape
    return jnp.pad(a, ((0, rows - r), (0, cols - c)))


# --------------------------------------------------------------------------
# Fused Pallas kernel: graph-structure one-hots + 2 GINE layers + head in VMEM
# --------------------------------------------------------------------------
def fused_gine_kernel(edge_ref, node_ref, w_ref, b_ref, pooled_ref, pred_ref):
    f32, bf16 = jnp.float32, jnp.bfloat16
    np_ = node_ref.shape[0]            # padded node count (multiple of 8)
    ep = edge_ref.shape[1]             # padded edge capacity (multiple of 128)
    gp = pooled_ref.shape[0]           # padded graph count (8)

    def oh(cond):                      # exact 0/1 bf16 matrix from a boolean mask
        return jnp.where(cond, 1.0, 0.0).astype(bf16)

    def wslab(off, rows):              # static view into the bf16 weight slab
        return w_ref[pl.ds(off, rows), :]

    def brow(r):                       # one f32 bias/BN row, broadcastable
        return b_ref[pl.ds(r, 1), :]

    edge = edge_ref[...]               # [8, ep] int32
    node = node_ref[...]               # [np_, 8] int32
    src, dst = edge[0:1, :], edge[1:2, :]
    ea1, ea2 = edge[2:3, :], edge[3:4, :]
    batch_row = edge[4:5, :np_]        # [1, np_]
    atom, chir = node[:, 0:1], node[:, 1:2]

    valid_e = dst >= 0                                     # [1, ep] (pads are -1)
    mask = jnp.where(atom >= 0, 1.0, 0.0)                  # [np_, 1] real-node mask

    # one-hots of edge endpoints (scatter/gather -> MXU matmuls)
    node_iota = jax.lax.broadcasted_iota(jnp.int32, (np_, ep), 0)
    S = oh((node_iota == dst) & valid_e)                   # dst one-hot [np_, ep]
    U = oh((node_iota == src) & valid_e)                   # src one-hot [np_, ep]

    # adjacency WITHOUT self loops: adj[i, j] = #edges j -> i   (counts, exact)
    adj_bf = jnp.einsum('ie,je->ij', S, U,
                        preferred_element_type=f32).astype(bf16)

    # per-destination (bond-type | bond-direction) counts + self-loop attr (4, 0)
    attr_iota = jax.lax.broadcasted_iota(jnp.int32, (EDGE_TBL_ROWS, ep), 0)
    attr_oh = oh(((attr_iota == ea1) | (attr_iota == ea2 + BOND_DIR_BASE)) & valid_e)
    C = jnp.einsum('ie,te->it', S, attr_oh, preferred_element_type=f32)  # [np_, 16]
    sl_iota = jax.lax.broadcasted_iota(jnp.int32, (1, EDGE_TBL_ROWS), 1)
    C = C + mask * jnp.where((sl_iota == 4) | (sl_iota == BOND_DIR_BASE), 1.0, 0.0)
    C_bf = C.astype(bf16)

    # node embeddings: one-hot over [atom | chirality] lanes @ stacked table
    lane_iota = jax.lax.broadcasted_iota(jnp.int32, (np_, LANE), 1)
    node_oh = oh(((lane_iota == atom) | (lane_iota == chir + CHIR_BASE))
                 & (atom >= 0))
    h = jnp.dot(node_oh, wslab(NODE_TBL_OFF, LANE),
                preferred_element_type=f32)                              # [np_, D]

    inv_n = 1.0 / jnp.sum(mask, keepdims=True)             # [1,1] = 1 / (#real nodes)

    for l in range(NUM_LAYER):                              # static unroll, h in VMEM
        # GINEConv aggregation: A@h (+h == self-loop x_i) + edge-embedding aggregate
        eagg = jnp.dot(C_bf, wslab(EDGE_OFF[l], EDGE_TBL_ROWS),
                       preferred_element_type=f32)
        aggr = (jnp.dot(adj_bf, h.astype(bf16), preferred_element_type=f32)
                + h + eagg)
        # update MLP: Linear(D, 2D) -> ReLU -> Linear(2D, D)
        h1 = jnp.maximum(
            jnp.dot(aggr.astype(bf16), wslab(W1_OFF[l], LANE),
                    preferred_element_type=f32) + brow(_b1(l)), 0.0)
        h2 = (jnp.dot(h1.astype(bf16), wslab(W2_OFF[l], LANE),
                      preferred_element_type=f32) + brow(_b2(l)))
        # BatchNorm1d (training-mode batch stats over real nodes, f32)
        mean = jnp.sum(h2 * mask, axis=0, keepdims=True) * inv_n
        diff = (h2 - mean) * mask
        var = jnp.sum(diff * diff, axis=0, keepdims=True) * inv_n
        scale = brow(_gamma(l)) * jax.lax.rsqrt(var + BN_EPS)
        shift = brow(_beta(l)) - mean * scale
        # F.dropout(F.relu(h), 0.0) == relu(h); mask keeps padded rows at zero
        h = jnp.maximum(h2 * scale + shift, 0.0) * mask

    # head: feat_lin -> global_mean_pool -> pred_lin (Linear -> ReLU -> Linear)
    feat = (jnp.dot(h.astype(bf16), wslab(WF_OFF, LANE),
                    preferred_element_type=f32) + brow(BF_ROW))          # [np_, F]

    gp_iota = jax.lax.broadcasted_iota(jnp.int32, (gp, np_), 0)
    P = oh(gp_iota == batch_row)                            # pure 0/1 pool one-hot
    counts = jnp.sum(P.astype(f32), axis=1, keepdims=True)  # [gp, 1]
    pooled = (jnp.dot(P, feat.astype(bf16), preferred_element_type=f32)
              / jnp.maximum(counts, 1.0))                   # 1/count applied in f32
    pooled_ref[...] = pooled

    p1 = jnp.maximum(
        jnp.dot(pooled.astype(bf16), wslab(WP1_OFF, LANE),
                preferred_element_type=f32) + brow(BP1_ROW), 0.0)
    pred_ref[...] = (jnp.dot(p1.astype(bf16), wslab(WP2_OFF, LANE),
                             preferred_element_type=f32) + brow(BP2_ROW))


# --------------------------------------------------------------------------
# One-time parameter packing (hoisted out of the per-call hot path)
# --------------------------------------------------------------------------
def prepare_params(params):
    f32, bf16 = jnp.float32, jnp.bfloat16
    hp = params['head']

    node_tbl = jnp.zeros((LANE, LANE), f32)
    node_tbl = node_tbl.at[:NUM_ATOM_TYPE, :EMB_DIM].set(params['x_emb1'])
    node_tbl = node_tbl.at[CHIR_BASE:CHIR_BASE + NUM_CHIRALITY_TAG,
                           :EMB_DIM].set(params['x_emb2'])

    w_rows = [node_tbl]
    for lp in params['layers']:
        etbl = jnp.zeros((EDGE_TBL_ROWS, LANE), f32)
        etbl = etbl.at[:NUM_BOND_TYPE, :EMB_DIM].set(lp['edge_emb1'])
        etbl = etbl.at[BOND_DIR_BASE:BOND_DIR_BASE + NUM_BOND_DIRECTION,
                       :EMB_DIM].set(lp['edge_emb2'])
        w_rows += [etbl, _pad2(lp['w1'], LANE, LANE), _pad2(lp['w2'], LANE, LANE)]
    w_rows += [_pad2(hp['wf'], LANE, LANE), _pad2(hp['wp1'], LANE, LANE),
               _pad2(hp['wp2'], LANE, LANE)]
    w_slab = jnp.concatenate(w_rows, axis=0).astype(bf16)
    assert w_slab.shape == (W_SLAB_ROWS, LANE)

    b_rows = []
    for lp in params['layers']:
        b_rows += [_pad2(lp['b1'], 1, LANE), _pad2(lp['b2'], 1, LANE),
                   _pad2(lp['gamma'], 1, LANE), _pad2(lp['beta'], 1, LANE)]
    b_rows += [_pad2(hp['bf'], 1, LANE), _pad2(hp['bp1'], 1, LANE),
               _pad2(hp['bp2'], 1, LANE)]
    b_slab = jnp.concatenate(
        b_rows + [jnp.zeros((B_SLAB_ROWS - len(b_rows), LANE), f32)], axis=0)
    return w_slab, b_slab


# --------------------------------------------------------------------------
# Forward wrapper (hot path: tiny int32 packing + one pallas_call)
# --------------------------------------------------------------------------
@functools.partial(jax.jit, static_argnames=('num_graphs',))
def gine_forward(w_slab, b_slab, x, edge_index, edge_attr, batch, num_graphs):
    n = x.shape[0]
    e = edge_index.shape[1]
    np_ = max(8, -(-n // 8) * 8)                           # sublane-padded nodes
    ep = max(128, -(-e // 128) * 128, -(-np_ // 128) * 128)  # lane-padded edges
    assert num_graphs <= GP and np_ <= ep

    # All graph-structure math (adjacency, edge-embedding aggregation, node
    # embeddings, pooling) happens inside the kernel from these int32 arrays.
    edge_int = jnp.full((8, ep), -1, jnp.int32)
    edge_int = edge_int.at[0, :e].set(edge_index[0].astype(jnp.int32))   # src
    edge_int = edge_int.at[1, :e].set(edge_index[1].astype(jnp.int32))   # dst
    edge_int = edge_int.at[2, :e].set(edge_attr[:, 0].astype(jnp.int32))  # bond type
    edge_int = edge_int.at[3, :e].set(edge_attr[:, 1].astype(jnp.int32))  # bond dir
    edge_int = edge_int.at[4, :n].set(batch.astype(jnp.int32))           # graph id
    node_int = jnp.full((np_, 8), -1, jnp.int32)
    node_int = node_int.at[:n, 0].set(x[:, 0].astype(jnp.int32))         # atom type
    node_int = node_int.at[:n, 1].set(x[:, 1].astype(jnp.int32))         # chirality

    vmem = pl.BlockSpec(memory_space=pltpu.MemorySpace.VMEM)
    pooled_p, pred_p = pl.pallas_call(
        fused_gine_kernel,
        out_shape=(jax.ShapeDtypeStruct((GP, LANE), jnp.float32),
                   jax.ShapeDtypeStruct((GP, LANE), jnp.float32)),
        in_specs=[vmem, vmem, vmem, vmem],
        out_specs=(vmem, vmem),
    )(edge_int, node_int, w_slab, b_slab)

    # strip graph-axis / lane padding outside the kernel
    return pooled_p[:num_graphs, :FEAT_DIM], pred_p[:num_graphs, :OUTPUT_DIM]


# --------------------------------------------------------------------------
# Deterministic parameter init (PyTorch-style)
# --------------------------------------------------------------------------
def xavier_uniform(key, shape):
    bound = (6.0 / (shape[0] + shape[1])) ** 0.5
    return jax.random.uniform(key, shape, jnp.float32, -bound, bound)


def linear_init(key, in_dim, out_dim):
    kw, kb = jax.random.split(key)
    bound = 1.0 / (in_dim ** 0.5)
    w = jax.random.uniform(kw, (in_dim, out_dim), jnp.float32, -bound, bound)
    b = jax.random.uniform(kb, (1, out_dim), jnp.float32, -bound, bound)
    return w, b


def init_params(key):
    kit = iter(jax.random.split(key, 64))
    params = {
        'x_emb1': xavier_uniform(next(kit), (NUM_ATOM_TYPE, EMB_DIM)),
        'x_emb2': xavier_uniform(next(kit), (NUM_CHIRALITY_TAG, EMB_DIM)),
        'layers': [],
    }
    for _ in range(NUM_LAYER):
        w1, b1 = linear_init(next(kit), EMB_DIM, 2 * EMB_DIM)
        w2, b2 = linear_init(next(kit), 2 * EMB_DIM, EMB_DIM)
        params['layers'].append({
            'edge_emb1': xavier_uniform(next(kit), (NUM_BOND_TYPE, EMB_DIM)),
            'edge_emb2': xavier_uniform(next(kit), (NUM_BOND_DIRECTION, EMB_DIM)),
            'w1': w1, 'b1': b1, 'w2': w2, 'b2': b2,
            'gamma': jnp.ones((1, EMB_DIM), jnp.float32),
            'beta': jnp.zeros((1, EMB_DIM), jnp.float32),
        })
    wf, bf = linear_init(next(kit), EMB_DIM, FEAT_DIM)
    wp1, bp1 = linear_init(next(kit), FEAT_DIM, FEAT_DIM // 2)
    wp2, bp2 = linear_init(next(kit), FEAT_DIM // 2, OUTPUT_DIM)
    params['head'] = {'wf': wf, 'bf': bf,
                      'wp1': wp1, 'bp1': bp1, 'wp2': wp2, 'bp2': bp2}
    return params


# --------------------------------------------------------------------------
if __name__ == "__main__":
    key = jax.random.PRNGKey(0)
    keys = jax.random.split(key, 8)

    N, E, G = 16, 24, 2
    x = jnp.stack([
        jax.random.randint(keys[0], (N,), 0, NUM_ATOM_TYPE),
        jax.random.randint(keys[1], (N,), 0, NUM_CHIRALITY_TAG)], axis=1)      # [N, 2]
    edge_index = jax.random.randint(keys[2], (2, E), 0, N)                     # [2, E]
    edge_attr = jnp.stack([
        jax.random.randint(keys[3], (E,), 0, 4),
        jax.random.randint(keys[4], (E,), 0, NUM_BOND_DIRECTION)], axis=1)     # [E, 2]
    batch = jnp.concatenate([jnp.zeros(N // 2, jnp.int32),
                             jnp.ones(N - N // 2, jnp.int32)])                 # [N]

    params = init_params(keys[5])
    w_slab, b_slab = prepare_params(params)        # one-time, cached across calls

    pooled, pred = gine_forward(w_slab, b_slab, x, edge_index, edge_attr, batch, G)
    jax.block_until_ready((pooled, pred))
    assert pooled.shape == (G, FEAT_DIM) and pred.shape == (G, OUTPUT_DIM)
    print("KERNEL_OK")
</pallas_src>

<mosaic_0001>
module attributes {stable_mosaic.version = 11 : i64} {
  func.func @fused_gine_kernel(%arg0: memref<8x128xi32, #tpu.memory_space<vmem>>, %arg1: memref<16x8xi32, #tpu.memory_space<vmem>>, %arg2: memref<1056x128xbf16, #tpu.memory_space<vmem>>, %arg3: memref<16x128xf32, #tpu.memory_space<vmem>>, %arg4: memref<8x128xf32, #tpu.memory_space<vmem>>, %arg5: memref<8x128xf32, #tpu.memory_space<vmem>>) attributes {dimension_semantics = [], scalar_prefetch = 0 : i64, scratch_operands = 0 : i64, tpu.core_type = #tpu.core_type<tc>} {
    %c0 = arith.constant 0 : index
    %c0_0 = arith.constant 0 : index
    %0 = vector.load %arg0[%c0, %c0_0] : memref<8x128xi32, #tpu.memory_space<vmem>>, vector<8x128xi32>
    %c0_1 = arith.constant 0 : index
    %c0_2 = arith.constant 0 : index
    %1 = vector.load %arg1[%c0_1, %c0_2] : memref<16x8xi32, #tpu.memory_space<vmem>>, vector<16x8xi32>
    %2 = vector.extract_strided_slice %0 {offsets = [0, 0], sizes = [1, 128], strides = [1, 1]} : vector<8x128xi32> to vector<1x128xi32>
    %3 = vector.extract_strided_slice %0 {offsets = [1, 0], sizes = [1, 128], strides = [1, 1]} : vector<8x128xi32> to vector<1x128xi32>
    %4 = vector.extract_strided_slice %0 {offsets = [2, 0], sizes = [1, 128], strides = [1, 1]} : vector<8x128xi32> to vector<1x128xi32>
    %5 = vector.extract_strided_slice %0 {offsets = [3, 0], sizes = [1, 128], strides = [1, 1]} : vector<8x128xi32> to vector<1x128xi32>
    %6 = vector.extract_strided_slice %0 {offsets = [4, 0], sizes = [1, 16], strides = [1, 1]} : vector<8x128xi32> to vector<1x16xi32>
    %7 = vector.extract_strided_slice %1 {offsets = [0, 0], sizes = [16, 1], strides = [1, 1]} : vector<16x8xi32> to vector<16x1xi32>
    %8 = vector.extract_strided_slice %1 {offsets = [0, 1], sizes = [16, 1], strides = [1, 1]} : vector<16x8xi32> to vector<16x1xi32>
    %c0_i32 = arith.constant 0 : i32
    %9 = vector.broadcast %c0_i32 : i32 to vector<1x128xi32>
    %10 = arith.cmpi sge, %3, %9 : vector<1x128xi32>
    %c0_i32_3 = arith.constant 0 : i32
    %11 = vector.broadcast %c0_i32_3 : i32 to vector<16x1xi32>
    %12 = arith.cmpi sge, %7, %11 : vector<16x1xi32>
    %cst = arith.constant 1.000000e+00 : f32
    %cst_4 = arith.constant 0.000000e+00 : f32
    %13 = vector.broadcast %cst : f32 to vector<16x1xf32>
    %14 = vector.broadcast %cst_4 : f32 to vector<16x1xf32>
    %15 = arith.select %12, %13, %14 : vector<16x1xi1>, vector<16x1xf32>
    %16 = tpu.iota {dimensions = array<i32: 0>} : vector<16x128xi32>
    %17 = vector.broadcast %3 : vector<1x128xi32> to vector<16x128xi32>
    %18 = arith.cmpi eq, %16, %17 : vector<16x128xi32>
    %19 = vector.broadcast %10 : vector<1x128xi1> to vector<16x128xi1>
    %20 = arith.andi %18, %19 : vector<16x128xi1>
    %cst_5 = arith.constant 1.000000e+00 : f32
    %cst_6 = arith.constant 0.000000e+00 : f32
    %21 = vector.broadcast %cst_5 : f32 to vector<16x128xf32>
    %22 = vector.broadcast %cst_6 : f32 to vector<16x128xf32>
    %23 = arith.select %20, %21, %22 : vector<16x128xi1>, vector<16x128xf32>
    %24 = arith.truncf %23 : vector<16x128xf32> to vector<16x128xbf16>
    %25 = vector.broadcast %2 : vector<1x128xi32> to vector<16x128xi32>
    %26 = arith.cmpi eq, %16, %25 : vector<16x128xi32>
    %27 = vector.broadcast %10 : vector<1x128xi1> to vector<16x128xi1>
    %28 = arith.andi %26, %27 : vector<16x128xi1>
    %cst_7 = arith.constant 1.000000e+00 : f32
    %cst_8 = arith.constant 0.000000e+00 : f32
    %29 = vector.broadcast %cst_7 : f32 to vector<16x128xf32>
    %30 = vector.broadcast %cst_8 : f32 to vector<16x128xf32>
    %31 = arith.select %28, %29, %30 : vector<16x128xi1>, vector<16x128xf32>
    %32 = arith.truncf %31 : vector<16x128xf32> to vector<16x128xbf16>
    "tpu.trace_start"() <{level = 10 : i32, message = "ie,je->ij"}> : () -> ()
    %cst_9 = arith.constant dense<0.000000e+00> : vector<16x16xf32>
    %33 = tpu.matmul %24, %32, %cst_9 {dimension_numbers = #tpu.dot_dimension_numbers<[1], [1], [0], [0], [0, 0, 1, 0], [], []>} : vector<16x128xbf16>, vector<16x128xbf16>, vector<16x16xf32> -> vector<16x16xf32>
    "tpu.trace_stop"() : () -> ()
    %34 = arith.truncf %33 : vector<16x16xf32> to vector<16x16xbf16>
    %35 = tpu.iota {dimensions = array<i32: 0>} : vector<16x128xi32>
    %36 = vector.broadcast %4 : vector<1x128xi32> to vector<16x128xi32>
    %37 = arith.cmpi eq, %35, %36 : vector<16x128xi32>
    %c6_i32 = arith.constant 6 : i32
    %38 = vector.broadcast %c6_i32 : i32 to vector<1x128xi32>
    %39 = arith.addi %5, %38 : vector<1x128xi32>
    %40 = vector.broadcast %39 : vector<1x128xi32> to vector<16x128xi32>
    %41 = arith.cmpi eq, %35, %40 : vector<16x128xi32>
    %42 = arith.ori %37, %41 : vector<16x128xi1>
    %43 = vector.broadcast %10 : vector<1x128xi1> to vector<16x128xi1>
    %44 = arith.andi %42, %43 : vector<16x128xi1>
    %cst_10 = arith.constant 1.000000e+00 : f32
    %cst_11 = arith.constant 0.000000e+00 : f32
    %45 = vector.broadcast %cst_10 : f32 to vector<16x128xf32>
    %46 = vector.broadcast %cst_11 : f32 to vector<16x128xf32>
    %47 = arith.select %44, %45, %46 : vector<16x128xi1>, vector<16x128xf32>
    %48 = arith.truncf %47 : vector<16x128xf32> to vector<16x128xbf16>
    "tpu.trace_start"() <{level = 10 : i32, message = "ie,te->it"}> : () -> ()
    %cst_12 = arith.constant dense<0.000000e+00> : vector<16x16xf32>
    %49 = tpu.matmul %24, %48, %cst_12 {dimension_numbers = #tpu.dot_dimension_numbers<[1], [1], [0], [0], [0, 0, 1, 0], [], []>} : vector<16x128xbf16>, vector<16x128xbf16>, vector<16x16xf32> -> vector<16x16xf32>
    "tpu.trace_stop"() : () -> ()
    %50 = tpu.iota {dimensions = array<i32: 1>} : vector<1x16xi32>
    %c4_i32 = arith.constant 4 : i32
    %51 = vector.broadcast %c4_i32 : i32 to vector<1x16xi32>
    %52 = arith.cmpi eq, %50, %51 : vector<1x16xi32>
    %c6_i32_13 = arith.constant 6 : i32
    %53 = vector.broadcast %c6_i32_13 : i32 to vector<1x16xi32>
    %54 = arith.cmpi eq, %50, %53 : vector<1x16xi32>
    %55 = arith.ori %52, %54 : vector<1x16xi1>
    %cst_14 = arith.constant 1.000000e+00 : f32
    %cst_15 = arith.constant 0.000000e+00 : f32
    %56 = vector.broadcast %cst_14 : f32 to vector<1x16xf32>
    %57 = vector.broadcast %cst_15 : f32 to vector<1x16xf32>
    %58 = arith.select %55, %56, %57 : vector<1x16xi1>, vector<1x16xf32>
    %59 = vector.broadcast %15 : vector<16x1xf32> to vector<16x16xf32>
    %60 = vector.broadcast %58 : vector<1x16xf32> to vector<16x16xf32>
    %61 = arith.mulf %59, %60 : vector<16x16xf32>
    %62 = arith.addf %49, %61 : vector<16x16xf32>
    %63 = arith.truncf %62 : vector<16x16xf32> to vector<16x16xbf16>
    %64 = tpu.iota {dimensions = array<i32: 1>} : vector<16x128xi32>
    %65 = vector.broadcast %7 : vector<16x1xi32> to vector<16x128xi32>
    %66 = arith.cmpi eq, %64, %65 : vector<16x128xi32>
    %c120_i32 = arith.constant 120 : i32
    %67 = vector.broadcast %c120_i32 : i32 to vector<16x1xi32>
    %68 = arith.addi %8, %67 : vector<16x1xi32>
    %69 = vector.broadcast %68 : vector<16x1xi32> to vector<16x128xi32>
    %70 = arith.cmpi eq, %64, %69 : vector<16x128xi32>
    %71 = arith.ori %66, %70 : vector<16x128xi1>
    %c0_i32_16 = arith.constant 0 : i32
    %72 = vector.broadcast %c0_i32_16 : i32 to vector<16x1xi32>
    %73 = arith.cmpi sge, %7, %72 : vector<16x1xi32>
    %74 = vector.broadcast %73 : vector<16x1xi1> to vector<16x128xi1>
    %75 = arith.andi %71, %74 : vector<16x128xi1>
    %cst_17 = arith.constant 1.000000e+00 : f32
    %cst_18 = arith.constant 0.000000e+00 : f32
    %76 = vector.broadcast %cst_17 : f32 to vector<16x128xf32>
    %77 = vector.broadcast %cst_18 : f32 to vector<16x128xf32>
    %78 = arith.select %75, %76, %77 : vector<16x128xi1>, vector<16x128xf32>
    %79 = arith.truncf %78 : vector<16x128xf32> to vector<16x128xbf16>
    %c0_19 = arith.constant 0 : index
    %c0_20 = arith.constant 0 : index
    %80 = vector.load %arg2[%c0_19, %c0_20] : memref<1056x128xbf16, #tpu.memory_space<vmem>>, vector<128x128xbf16>
    %cst_21 = arith.constant dense<0.000000e+00> : vector<16x128xf32>
    %81 = tpu.matmul %79, %80, %cst_21 {dimension_numbers = #tpu.dot_dimension_numbers<[1], [0], [0], [1], [0, 0, 1, 1], [], []>} : vector<16x128xbf16>, vector<128x128xbf16>, vector<16x128xf32> -> vector<16x128xf32>
    %82 = vector.shape_cast %15 : vector<16x1xf32> to vector<1x16x1xf32>
    %cst_22 = arith.constant dense<0.000000e+00> : vector<1xf32>
    %83 = vector.multi_reduction <add>, %82, %cst_22 [1, 2] : vector<1x16x1xf32> to vector<1xf32>
    %84 = vector.shape_cast %83 : vector<1xf32> to vector<1x1x1xf32>
    %85 = vector.extract %84[0, 0, 0] : f32 from vector<1x1x1xf32>
    %86 = vector.broadcast %85 : f32 to vector<1x1xf32>
    %cst_23 = arith.constant 1.000000e+00 : f32
    %87 = vector.broadcast %cst_23 : f32 to vector<1x1xf32>
    %88 = arith.divf %87, %86 : vector<1x1xf32>
    %c128 = arith.constant 128 : index
    %c0_24 = arith.constant 0 : index
    %89 = vector.load %arg2[%c128, %c0_24] : memref<1056x128xbf16, #tpu.memory_space<vmem>>, vector<16x128xbf16>
    %cst_25 = arith.constant dense<0.000000e+00> : vector<16x128xf32>
    %90 = tpu.matmul %63, %89, %cst_25 {dimension_numbers = #tpu.dot_dimension_numbers<[1], [0], [0], [1], [0, 0, 1, 1], [], []>} : vector<16x16xbf16>, vector<16x128xbf16>, vector<16x128xf32> -> vector<16x128xf32>
    %91 = arith.truncf %81 : vector<16x128xf32> to vector<16x128xbf16>
    %cst_26 = arith.constant dense<0.000000e+00> : vector<16x128xf32>
    %92 = tpu.matmul %34, %91, %cst_26 {dimension_numbers = #tpu.dot_dimension_numbers<[1], [0], [0], [1], [0, 0, 1, 1], [], []>} : vector<16x16xbf16>, vector<16x128xbf16>, vector<16x128xf32> -> vector<16x128xf32>
    %93 = arith.addf %92, %81 : vector<16x128xf32>
    %94 = arith.addf %93, %90 : vector<16x128xf32>
    %95 = arith.truncf %94 : vector<16x128xf32> to vector<16x128xbf16>
    %c144 = arith.constant 144 : index
    %c0_27 = arith.constant 0 : index
    %96 = vector.load %arg2[%c144, %c0_27] : memref<1056x128xbf16, #tpu.memory_space<vmem>>, vector<128x128xbf16>
    %cst_28 = arith.constant dense<0.000000e+00> : vector<16x128xf32>
    %97 = tpu.matmul %95, %96, %cst_28 {dimension_numbers = #tpu.dot_dimension_numbers<[1], [0], [0], [1], [0, 0, 1, 1], [], []>} : vector<16x128xbf16>, vector<128x128xbf16>, vector<16x128xf32> -> vector<16x128xf32>
    %c0_29 = arith.constant 0 : index
    %c0_30 = arith.constant 0 : index
    %98 = vector.load %arg3[%c0_29, %c0_30] : memref<16x128xf32, #tpu.memory_space<vmem>>, vector<1x128xf32>
    %99 = vector.broadcast %98 : vector<1x128xf32> to vector<16x128xf32>
    %100 = arith.addf %97, %99 : vector<16x128xf32>
    %cst_31 = arith.constant 0.000000e+00 : f32
    %101 = vector.broadcast %cst_31 : f32 to vector<16x128xf32>
    %102 = arith.maximumf %100, %101 : vector<16x128xf32>
    %103 = arith.truncf %102 : vector<16x128xf32> to vector<16x128xbf16>
    %c272 = arith.constant 272 : index
    %c0_32 = arith.constant 0 : index
    %104 = vector.load %arg2[%c272, %c0_32] : memref<1056x128xbf16, #tpu.memory_space<vmem>>, vector<128x128xbf16>
    %cst_33 = arith.constant dense<0.000000e+00> : vector<16x128xf32>
    %105 = tpu.matmul %103, %104, %cst_33 {dimension_numbers = #tpu.dot_dimension_numbers<[1], [0], [0], [1], [0, 0, 1, 1], [], []>} : vector<16x128xbf16>, vector<128x128xbf16>, vector<16x128xf32> -> vector<16x128xf32>
    %c1 = arith.constant 1 : index
    %c0_34 = arith.constant 0 : index
    %106 = vector.load %arg3[%c1, %c0_34] : memref<16x128xf32, #tpu.memory_space<vmem>>, vector<1x128xf32>
    %107 = vector.broadcast %106 : vector<1x128xf32> to vector<16x128xf32>
    %108 = arith.addf %105, %107 : vector<16x128xf32>
    %109 = vector.broadcast %15 : vector<16x1xf32> to vector<16x128xf32>
    %110 = arith.mulf %108, %109 : vector<16x128xf32>
    %cst_35 = arith.constant dense<0.000000e+00> : vector<128xf32>
    %111 = vector.multi_reduction <add>, %110, %cst_35 [0] : vector<16x128xf32> to vector<128xf32>
    %112 = vector.shape_cast %111 : vector<128xf32> to vector<1x128xf32>
    %113 = vector.broadcast %88 : vector<1x1xf32> to vector<1x128xf32>
    %114 = arith.mulf %112, %113 : vector<1x128xf32>
    %115 = vector.broadcast %114 : vector<1x128xf32> to vector<16x128xf32>
    %116 = arith.subf %108, %115 : vector<16x128xf32>
    %117 = vector.broadcast %15 : vector<16x1xf32> to vector<16x128xf32>
    %118 = arith.mulf %116, %117 : vector<16x128xf32>
    %119 = arith.mulf %118, %118 : vector<16x128xf32>
    %cst_36 = arith.constant dense<0.000000e+00> : vector<128xf32>
    %120 = vector.multi_reduction <add>, %119, %cst_36 [0] : vector<16x128xf32> to vector<128xf32>
    %121 = vector.shape_cast %120 : vector<128xf32> to vector<1x128xf32>
    %122 = vector.broadcast %88 : vector<1x1xf32> to vector<1x128xf32>
    %123 = arith.mulf %121, %122 : vector<1x128xf32>
    %c2 = arith.constant 2 : index
    %c0_37 = arith.constant 0 : index
    %124 = vector.load %arg3[%c2, %c0_37] : memref<16x128xf32, #tpu.memory_space<vmem>>, vector<1x128xf32>
    %cst_38 = arith.constant 9.99999974E-6 : f32
    %125 = vector.broadcast %cst_38 : f32 to vector<1x128xf32>
    %126 = arith.addf %123, %125 : vector<1x128xf32>
    %127 = math.rsqrt %126 : vector<1x128xf32>
    %128 = arith.mulf %124, %127 : vector<1x128xf32>
    %c3 = arith.constant 3 : index
    %c0_39 = arith.constant 0 : index
    %129 = vector.load %arg3[%c3, %c0_39] : memref<16x128xf32, #tpu.memory_space<vmem>>, vector<1x128xf32>
    %130 = arith.mulf %114, %128 : vector<1x128xf32>
    %131 = arith.subf %129, %130 : vector<1x128xf32>
    %132 = vector.broadcast %128 : vector<1x128xf32> to vector<16x128xf32>
    %133 = arith.mulf %108, %132 : vector<16x128xf32>
    %134 = vector.broadcast %131 : vector<1x128xf32> to vector<16x128xf32>
    %135 = arith.addf %133, %134 : vector<16x128xf32>
    %cst_40 = arith.constant 0.000000e+00 : f32
    %136 = vector.broadcast %cst_40 : f32 to vector<16x128xf32>
    %137 = arith.maximumf %135, %136 : vector<16x128xf32>
    %138 = vector.broadcast %15 : vector<16x1xf32> to vector<16x128xf32>
    %139 = arith.mulf %137, %138 : vector<16x128xf32>
    %c400 = arith.constant 400 : index
    %c0_41 = arith.constant 0 : index
    %140 = vector.load %arg2[%c400, %c0_41] : memref<1056x128xbf16, #tpu.memory_space<vmem>>, vector<16x128xbf16>
    %cst_42 = arith.constant dense<0.000000e+00> : vector<16x128xf32>
    %141 = tpu.matmul %63, %140, %cst_42 {dimension_numbers = #tpu.dot_dimension_numbers<[1], [0], [0], [1], [0, 0, 1, 1], [], []>} : vector<16x16xbf16>, vector<16x128xbf16>, vector<16x128xf32> -> vector<16x128xf32>
    %142 = arith.truncf %139 : vector<16x128xf32> to vector<16x128xbf16>
    %cst_43 = arith.constant dense<0.000000e+00> : vector<16x128xf32>
    %143 = tpu.matmul %34, %142, %cst_43 {dimension_numbers = #tpu.dot_dimension_numbers<[1], [0], [0], [1], [0, 0, 1, 1], [], []>} : vector<16x16xbf16>, vector<16x128xbf16>, vector<16x128xf32> -> vector<16x128xf32>
    %144 = arith.addf %143, %139 : vector<16x128xf32>
    %145 = arith.addf %144, %141 : vector<16x128xf32>
    %146 = arith.truncf %145 : vector<16x128xf32> to vector<16x128xbf16>
    %c416 = arith.constant 416 : index
    %c0_44 = arith.constant 0 : index
    %147 = vector.load %arg2[%c416, %c0_44] : memref<1056x128xbf16, #tpu.memory_space<vmem>>, vector<128x128xbf16>
    %cst_45 = arith.constant dense<0.000000e+00> : vector<16x128xf32>
    %148 = tpu.matmul %146, %147, %cst_45 {dimension_numbers = #tpu.dot_dimension_numbers<[1], [0], [0], [1], [0, 0, 1, 1], [], []>} : vector<16x128xbf16>, vector<128x128xbf16>, vector<16x128xf32> -> vector<16x128xf32>
    %c4 = arith.constant 4 : index
    %c0_46 = arith.constant 0 : index
    %149 = vector.load %arg3[%c4, %c0_46] : memref<16x128xf32, #tpu.memory_space<vmem>>, vector<1x128xf32>
    %150 = vector.broadcast %149 : vector<1x128xf32> to vector<16x128xf32>
    %151 = arith.addf %148, %150 : vector<16x128xf32>
    %cst_47 = arith.constant 0.000000e+00 : f32
    %152 = vector.broadcast %cst_47 : f32 to vector<16x128xf32>
    %153 = arith.maximumf %151, %152 : vector<16x128xf32>
    %154 = arith.truncf %153 : vector<16x128xf32> to vector<16x128xbf16>
    %c544 = arith.constant 544 : index
    %c0_48 = arith.constant 0 : index
    %155 = vector.load %arg2[%c544, %c0_48] : memref<1056x128xbf16, #tpu.memory_space<vmem>>, vector<128x128xbf16>
    %cst_49 = arith.constant dense<0.000000e+00> : vector<16x128xf32>
    %156 = tpu.matmul %154, %155, %cst_49 {dimension_numbers = #tpu.dot_dimension_numbers<[1], [0], [0], [1], [0, 0, 1, 1], [], []>} : vector<16x128xbf16>, vector<128x128xbf16>, vector<16x128xf32> -> vector<16x128xf32>
    %c5 = arith.constant 5 : index
    %c0_50 = arith.constant 0 : index
    %157 = vector.load %arg3[%c5, %c0_50] : memref<16x128xf32, #tpu.memory_space<vmem>>, vector<1x128xf32>
    %158 = vector.broadcast %157 : vector<1x128xf32> to vector<16x128xf32>
    %159 = arith.addf %156, %158 : vector<16x128xf32>
    %160 = vector.broadcast %15 : vector<16x1xf32> to vector<16x128xf32>
    %161 = arith.mulf %159, %160 : vector<16x128xf32>
    %cst_51 = arith.constant dense<0.000000e+00> : vector<128xf32>
    %162 = vector.multi_reduction <add>, %161, %cst_51 [0] : vector<16x128xf32> to vector<128xf32>
    %163 = vector.shape_cast %162 : vector<128xf32> to vector<1x128xf32>
    %164 = vector.broadcast %88 : vector<1x1xf32> to vector<1x128xf32>
    %165 = arith.mulf %163, %164 : vector<1x128xf32>
    %166 = vector.broadcast %165 : vector<1x128xf32> to vector<16x128xf32>
    %167 = arith.subf %159, %166 : vector<16x128xf32>
    %168 = vector.broadcast %15 : vector<16x1xf32> to vector<16x128xf32>
    %169 = arith.mulf %167, %168 : vector<16x128xf32>
    %170 = arith.mulf %169, %169 : vector<16x128xf32>
    %cst_52 = arith.constant dense<0.000000e+00> : vector<128xf32>
    %171 = vector.multi_reduction <add>, %170, %cst_52 [0] : vector<16x128xf32> to vector<128xf32>
    %172 = vector.shape_cast %171 : vector<128xf32> to vector<1x128xf32>
    %173 = vector.broadcast %88 : vector<1x1xf32> to vector<1x128xf32>
    %174 = arith.mulf %172, %173 : vector<1x128xf32>
    %c6 = arith.constant 6 : index
    %c0_53 = arith.constant 0 : index
    %175 = vector.load %arg3[%c6, %c0_53] : memref<16x128xf32, #tpu.memory_space<vmem>>, vector<1x128xf32>
    %cst_54 = arith.constant 9.99999974E-6 : f32
    %176 = vector.broadcast %cst_54 : f32 to vector<1x128xf32>
    %177 = arith.addf %174, %176 : vector<1x128xf32>
    %178 = math.rsqrt %177 : vector<1x128xf32>
    %179 = arith.mulf %175, %178 : vector<1x128xf32>
    %c7 = arith.constant 7 : index
    %c0_55 = arith.constant 0 : index
    %180 = vector.load %arg3[%c7, %c0_55] : memref<16x128xf32, #tpu.memory_space<vmem>>, vector<1x128xf32>
    %181 = arith.mulf %165, %179 : vector<1x128xf32>
    %182 = arith.subf %180, %181 : vector<1x128xf32>
    %183 = vector.broadcast %179 : vector<1x128xf32> to vector<16x128xf32>
    %184 = arith.mulf %159, %183 : vector<16x128xf32>
    %185 = vector.broadcast %182 : vector<1x128xf32> to vector<16x128xf32>
    %186 = arith.addf %184, %185 : vector<16x128xf32>
    %cst_56 = arith.constant 0.000000e+00 : f32
    %187 = vector.broadcast %cst_56 : f32 to vector<16x128xf32>
    %188 = arith.maximumf %186, %187 : vector<16x128xf32>
    %189 = vector.broadcast %15 : vector<16x1xf32> to vector<16x128xf32>
    %190 = arith.mulf %188, %189 : vector<16x128xf32>
    %191 = arith.truncf %190 : vector<16x128xf32> to vector<16x128xbf16>
    %c672 = arith.constant 672 : index
    %c0_57 = arith.constant 0 : index
    %192 = vector.load %arg2[%c672, %c0_57] : memref<1056x128xbf16, #tpu.memory_space<vmem>>, vector<128x128xbf16>
    %cst_58 = arith.constant dense<0.000000e+00> : vector<16x128xf32>
    %193 = tpu.matmul %191, %192, %cst_58 {dimension_numbers = #tpu.dot_dimension_numbers<[1], [0], [0], [1], [0, 0, 1, 1], [], []>} : vector<16x128xbf16>, vector<128x128xbf16>, vector<16x128xf32> -> vector<16x128xf32>
    %c8 = arith.constant 8 : index
    %c0_59 = arith.constant 0 : index
    %194 = vector.load %arg3[%c8, %c0_59] : memref<16x128xf32, #tpu.memory_space<vmem>>, vector<1x128xf32>
    %195 = vector.broadcast %194 : vector<1x128xf32> to vector<16x128xf32>
    %196 = arith.addf %193, %195 : vector<16x128xf32>
    %197 = tpu.iota {dimensions = array<i32: 0>} : vector<8x16xi32>
    %198 = vector.broadcast %6 : vector<1x16xi32> to vector<8x16xi32>
    %199 = arith.cmpi eq, %197, %198 : vector<8x16xi32>
    %cst_60 = arith.constant 1.000000e+00 : f32
    %cst_61 = arith.constant 0.000000e+00 : f32
    %200 = vector.broadcast %cst_60 : f32 to vector<8x16xf32>
    %201 = vector.broadcast %cst_61 : f32 to vector<8x16xf32>
    %202 = arith.select %199, %200, %201 : vector<8x16xi1>, vector<8x16xf32>
    %203 = arith.truncf %202 : vector<8x16xf32> to vector<8x16xbf16>
    %204 = arith.extf %203 : vector<8x16xbf16> to vector<8x16xf32>
    %cst_62 = arith.constant dense<0.000000e+00> : vector<8xf32>
    %205 = vector.multi_reduction <add>, %204, %cst_62 [1] : vector<8x16xf32> to vector<8xf32>
    %206 = vector.shape_cast %205 : vector<8xf32> to vector<8x1xf32>
    %207 = arith.truncf %196 : vector<16x128xf32> to vector<16x128xbf16>
    %cst_63 = arith.constant dense<0.000000e+00> : vector<8x128xf32>
    %208 = tpu.matmul %203, %207, %cst_63 {dimension_numbers = #tpu.dot_dimension_numbers<[1], [0], [0], [1], [0, 0, 1, 1], [], []>} : vector<8x16xbf16>, vector<16x128xbf16>, vector<8x128xf32> -> vector<8x128xf32>
    %cst_64 = arith.constant 1.000000e+00 : f32
    %209 = vector.broadcast %cst_64 : f32 to vector<8x1xf32>
    %210 = arith.maximumf %206, %209 : vector<8x1xf32>
    %211 = vector.broadcast %210 : vector<8x1xf32> to vector<8x128xf32>
    %212 = arith.divf %208, %211 : vector<8x128xf32>
    %c0_65 = arith.constant 0 : index
    %c0_66 = arith.constant 0 : index
    %213 = vector.load %arg4[%c0_65, %c0_66] : memref<8x128xf32, #tpu.memory_space<vmem>>, vector<8x128xf32>
    tpu.vector_store %arg4[%c0_65, %c0_66], %212 {strides = array<i32>} : memref<8x128xf32, #tpu.memory_space<vmem>>, vector<8x128xf32>,
    %214 = arith.truncf %212 : vector<8x128xf32> to vector<8x128xbf16>
    %c800 = arith.constant 800 : index
    %c0_67 = arith.constant 0 : index
    %215 = vector.load %arg2[%c800, %c0_67] : memref<1056x128xbf16, #tpu.memory_space<vmem>>, vector<128x128xbf16>
    %cst_68 = arith.constant dense<0.000000e+00> : vector<8x128xf32>
    %216 = tpu.matmul %214, %215, %cst_68 {dimension_numbers = #tpu.dot_dimension_numbers<[1], [0], [0], [1], [0, 0, 1, 1], [], []>} : vector<8x128xbf16>, vector<128x128xbf16>, vector<8x128xf32> -> vector<8x128xf32>
    %c9 = arith.constant 9 : index
    %c0_69 = arith.constant 0 : index
    %217 = vector.load %arg3[%c9, %c0_69] : memref<16x128xf32, #tpu.memory_space<vmem>>, vector<1x128xf32>
    %218 = vector.broadcast %217 : vector<1x128xf32> to vector<8x128xf32>
    %219 = arith.addf %216, %218 : vector<8x128xf32>
    %cst_70 = arith.constant 0.000000e+00 : f32
    %220 = vector.broadcast %cst_70 : f32 to vector<8x128xf32>
    %221 = arith.maximumf %219, %220 : vector<8x128xf32>
    %222 = arith.truncf %221 : vector<8x128xf32> to vector<8x128xbf16>
    %c928 = arith.constant 928 : index
    %c0_71 = arith.constant 0 : index
    %223 = vector.load %arg2[%c928, %c0_71] : memref<1056x128xbf16, #tpu.memory_space<vmem>>, vector<128x128xbf16>
    %cst_72 = arith.constant dense<0.000000e+00> : vector<8x128xf32>
    %224 = tpu.matmul %222, %223, %cst_72 {dimension_numbers = #tpu.dot_dimension_numbers<[1], [0], [0], [1], [0, 0, 1, 1], [], []>} : vector<8x128xbf16>, vector<128x128xbf16>, vector<8x128xf32> -> vector<8x128xf32>
    %c10 = arith.constant 10 : index
    %c0_73 = arith.constant 0 : index
    %225 = vector.load %arg3[%c10, %c0_73] : memref<16x128xf32, #tpu.memory_space<vmem>>, vector<1x128xf32>
    %226 = vector.broadcast %225 : vector<1x128xf32> to vector<8x128xf32>
    %227 = arith.addf %224, %226 : vector<8x128xf32>
    %c0_74 = arith.constant 0 : index
    %c0_75 = arith.constant 0 : index
    %228 = vector.load %arg5[%c0_74, %c0_75] : memref<8x128xf32, #tpu.memory_space<vmem>>, vector<8x128xf32>
    tpu.vector_store %arg5[%c0_74, %c0_75], %227 {strides = array<i32>} : memref<8x128xf32, #tpu.memory_space<vmem>>, vector<8x128xf32>,
    return
  }
}

</mosaic_0001>

<llo_original>
// kernel: gine_forward.1
$region0: #{gine_forward.1}
  #allocation0 [shape = 'u32[]', space=smem, size = 0x4, offset = 0x4, fixed_abs, tag = 'smem constant byte address 0x4 - core index']
  #allocation1 [shape = 'u32[72,128]{1,0:T(1,128)}', space=vmem, size = 0x9000, scoped, tag = 'internal scratch']
  %s0 = inlined_call_operand.vmem [shape: s32[8,128], index: 0, kind: input, shape index: {}]
  %s1 = inlined_call_operand.vmem [shape: s32[16,8], index: 1, kind: input, shape index: {}]
  %s2 = inlined_call_operand.hbm [shape: bf16[1056,128], index: 2, kind: input, shape index: {}]
  %s3 = inlined_call_operand.vmem [shape: f32[16,128], index: 3, kind: input, shape index: {}]
  %s4 = inlined_call_operand.vmem [shape: f32[8,128], index: 4, kind: output, shape index: {0}]
  %s5 = inlined_call_operand.vmem [shape: f32[8,128], index: 5, kind: output, shape index: {1}]
  %6 = xla_tuple %s4, %s5
  %s7 = sld [smem:[#allocation0]]
  $region38: #{gine_forward.1} parent=0
    _
  %s9 = ssub.s32 1, %s7
  %s10 = scalar_select 0, %s9, %s7
  $region1: #{gine_forward.1} parent=0
    #allocation2 [shape = 'u8[270336]{0}', space=vmem, size = 0x42000, scoped, tag = 'input window, operand 2, single buffered']
    #allocation3 [shape = 's32[1]{0}', space=sflag, size = 0x4, scoped, tag = 'scoped memory for gine_forward.1']
    %11 = vsyncpa [#allocation3], 0
    // Predicated region
    $region2: #{gine_forward.1} parent=1 // pred_check
      _
    $region3: #{gine_forward.1} parent=1 // pred_check_branch
      %13 = sbr.rel (0) target = $region5
    $region4: #{gine_forward.1} parent=1 // pred_region
      _
    $region5: #{gine_forward.1} parent=1 // pred_fallthru
      _
    // Predicated region
    $region6: #{gine_forward.1} parent=1 // pred_check
      _
    $region7: #{gine_forward.1} parent=1 // pred_check_branch
      %15 = sbr.rel (0) target = $region9
    $region8: #{gine_forward.1} parent=1 // pred_region
      _
    $region9: #{gine_forward.1} parent=1 // pred_fallthru
      _
    // Predicated region
    $region10: #{gine_forward.1} parent=1 // pred_check
      _
    $region11: #{gine_forward.1} parent=1 // pred_check_branch
      %17 = sbr.rel (0) target = $region13
    $region12: #{gine_forward.1} parent=1 // pred_region
      %19 = vsyncadd [#allocation3], 0
      %s20 = sshll.u32 %s2, 4
      %s21 = int_to_ptr.hbm [resolvable:$true] %s20
      %s22 = sshll.u32 [#allocation2], 4
      %s23 = int_to_ptr.vmem [resolvable:$true] %s22
      %28 = dma.hbm_to_vmem [thread:$0]  %s21, 8448, %s23, [#allocation3], 64, 64, 4
    $region13: #{gine_forward.1} parent=1 // pred_fallthru
      _
    // Predicated region
    $region14: #{gine_forward.1} parent=1 // pred_check
      _
    $region15: #{gine_forward.1} parent=1 // pred_check_branch
      %30 = sbr.rel (0) target = $region17
    $region16: #{gine_forward.1} parent=1 // pred_region
      _
    $region17: #{gine_forward.1} parent=1 // pred_fallthru
      _
    // Predicated region
    $region18: #{gine_forward.1} parent=1 // pred_check
      _
    $region19: #{gine_forward.1} parent=1 // pred_check_branch
      %32 = sbr.rel (0) target = $region21
    $region20: #{gine_forward.1} parent=1 // pred_region
      %34 = dma.done [#allocation3], 8448
    $region21: #{gine_forward.1} parent=1 // pred_fallthru
      _
    %v36 = vld [vmem:[%s0] sm:$0xff]
    %v37 = vld [vmem:[%s1] sm:$0xff]
    %v38 = vld [vmem:[%s1 + $0x8] sm:$0xff]
    %vm39 = vcmp.ge.s32.totalorder %v36, 0
    %vm40 = vcmp.ge.s32.totalorder %v37, 0
    %vm41 = vcmp.ge.s32.totalorder %v38, 0
    %v42 = vsel %vm40, 1.0, 0.0
    %v43 = vsel %vm41, 1.0, 0.0
    %v44 = vlaneseq
    %v45 = vshrl.u32 %v44, 7
    %v46 = vadd.s32 %v45, 8
    %v47 = vperm.slane %v36, 1
    %vm48 = vcmp.eq.s32.totalorder %v45, %v47
    %vm49 = vcmp.eq.s32.totalorder %v46, %v47
    %v50 = vsel %vm39, 1, 0
    %v51 = vperm.slane %v50, 1
    %vm52 = vcmp.eq.s32.totalorder %v51, 1
    %vm53 = vmand %vm48, %vm52
    %vm54 = vmand %vm49, %vm52
    %v55 = vsel %vm53, 1.0, 0.0
    %v56 = vsel %vm54, 1.0, 0.0
    %v57 = vpack.c.bf16 %v56, %v55
    %v58 = vperm.slane %v36, 0
    %vm59 = vcmp.eq.s32.totalorder %v45, %v58
    %vm60 = vcmp.eq.s32.totalorder %v46, %v58
    %vm61 = vmand %vm59, %vm52
    %vm62 = vmand %vm60, %vm52
    %v63 = vsel %vm61, 1.0, 0.0
    %v64 = vsel %vm62, 1.0, 0.0
    %v65 = vpack.c.bf16 %v64, %v63
    %66 = vmatpush.bf16.xpose.msra.mxu0 0
    %67 = vmatpush.bf16.xpose.msra.mxu0 0
    %68 = vmatpush.bf16.xpose.msra.mxu0 0
    %69 = vmatpush.bf16.xpose.msra.mxu0 0
    %70 = vmatpush.bf16.xpose.msra.mxu0 0
    %71 = vmatpush.bf16.xpose.msra.mxu0 0
    %72 = vmatpush.bf16.xpose.msra.mxu0 0
    %73 = vmatpush.bf16.xpose.msra.mxu0 %v65
    %74 = vmatmul.bf16.gmra.mxu0 %v57
    %v75 = vpop.f32.mrf.mxu0
    %v76 = vadd.f32 0.0, %v75
    %v77 = vpop.f32.mrf.mxu0
    %v78 = vadd.f32 0.0, %v77
    %79 = vdwg.mxu0
    %v80 = vpack.c.bf16 %v78, %v76
    %v81 = vperm.slane %v36, 2
    %vm82 = vcmp.eq.s32.totalorder %v45, %v81
    %vm83 = vcmp.eq.s32.totalorder %v46, %v81
    %v84 = vadd.s32 %v36, 6
    %v85 = vperm.slane %v84, 3
    %vm86 = vcmp.eq.s32.totalorder %v45, %v85
    %vm87 = vcmp.eq.s32.totalorder %v46, %v85
    %vm88 = vmor %vm82, %vm86
    %vm89 = vmor %vm83, %vm87
    %vm90 = vmand %vm88, %vm52
    %vm91 = vmand %vm89, %vm52
    %v92 = vsel %vm90, 1.0, 0.0
    %v93 = vsel %vm91, 1.0, 0.0
    %v94 = vpack.c.bf16 %v93, %v92
    %v95 = vlaneseq
    %v96 = vand.u32 %v95, 127
    %vm97 = vcmp.eq.s32.totalorder %v96, 4
    %vm98 = vcmp.eq.s32.totalorder %v96, 6
    %vm99 = vmor %vm97, %vm98
    %v100 = vsel %vm99, 1.0, 0.0
    %102 = vset.pattern.permute.xlu0 0
    %103 = vperm.xlu0 %102, %v42
    %v104 = vpop.permute.xlu0 %103
    %107 = vset.pattern.permute.xlu0 0
    %108 = vperm.xlu0 %107, %v43
    %v109 = vpop.permute.xlu0 %108
    %v111 = vmul.f32 %v104, %v100
    %v112 = vmul.f32 %v109, %v100
    %113 = vmatpush.bf16.xpose.msra.mxu0 0
    %114 = vmatpush.bf16.xpose.msra.mxu0 0
    %115 = vmatpush.bf16.xpose.msra.mxu0 0
    %116 = vmatpush.bf16.xpose.msra.mxu0 0
    %117 = vmatpush.bf16.xpose.msra.mxu0 0
    %118 = vmatpush.bf16.xpose.msra.mxu0 0
    %119 = vmatpush.bf16.xpose.msra.mxu0 0
    %120 = vmatpush.bf16.xpose.msra.mxu0 %v94
    %121 = vmatmul.bf16.gmra.mxu0 %v57
    %v122 = vpop.f32.mrf.mxu0
    %v123 = vadd.f32 %v111, %v122
    %v124 = vpop.f32.mrf.mxu0
    %v125 = vadd.f32 %v112, %v124
    %126 = vdwg.mxu0
    %v127 = vpack.c.bf16 %v125, %v123
    %128 = vset.pattern.permute.xlu0 0
    %129 = vperm.xlu0 %128, %v37
    %v130 = vpop.permute.xlu0 %129
    %131 = vset.pattern.permute.xlu0 0
    %132 = vperm.xlu0 %131, %v38
    %v133 = vpop.permute.xlu0 %132
    %vm134 = vcmp.eq.s32.totalorder %v96, %v130
    %vm135 = vcmp.eq.s32.totalorder %v96, %v133
    %v136 = vadd.s32 %v37, 120
    %v137 = vadd.s32 %v38, 120
    %138 = vset.pattern.permute.xlu0 1
    %139 = vperm.xlu0 %138, %v136
    %v140 = vpop.permute.xlu0 %139
    %141 = vset.pattern.permute.xlu0 1
    %142 = vperm.xlu0 %141, %v137
    %v143 = vpop.permute.xlu0 %142
    %vm144 = vcmp.eq.s32.totalorder %v96, %v140
    %vm145 = vcmp.eq.s32.totalorder %v96, %v143
    %vm146 = vmor %vm134, %vm144
    %vm147 = vmor %vm135, %vm145
    %v148 = vsel %vm40, 1, 0
    %v149 = vsel %vm41, 1, 0
    %150 = vset.pattern.permute.xlu0 0
    %151 = vperm.xlu0 %150, %v148
    %v152 = vpop.permute.xlu0 %151
    %153 = vset.pattern.permute.xlu0 0
    %154 = vperm.xlu0 %153, %v149
    %v155 = vpop.permute.xlu0 %154
    %vm156 = vcmp.eq.s32.totalorder %v152, 1
    %vm157 = vcmp.eq.s32.totalorder %v155, 1
    %vm158 = vmand %vm146, %vm156
    %vm159 = vmand %vm147, %vm157
    %v160 = vsel %vm158, 1.0, 0.0
    %v161 = vsel %vm159, 1.0, 0.0
    %v162 = vpack.c.bf16 %v161, %v160
    %v163 = vld [vmem:[#allocation2] sm:$0xf]
    %v164 = vld [vmem:[#allocation2 + $0x4] sm:$0xf]
    %v165 = vld [vmem:[#allocation2 + $0x8] sm:$0xf]
    %v166 = vld [vmem:[#allocation2 + $0xc] sm:$0xf]
    %v167 = vld [vmem:[#allocation2 + $0x10] sm:$0xf]
    %v168 = vld [vmem:[#allocation2 + $0x14] sm:$0xf]
    %v169 = vld [vmem:[#allocation2 + $0x18] sm:$0xf]
    %v170 = vld [vmem:[#allocation2 + $0x1c] sm:$0xf]
    %v171 = vld [vmem:[#allocation2 + $0x20] sm:$0xf]
    %v172 = vld [vmem:[#allocation2 + $0x24] sm:$0xf]
    %v173 = vld [vmem:[#allocation2 + $0x28] sm:$0xf]
    %v174 = vld [vmem:[#allocation2 + $0x2c] sm:$0xf]
    %v175 = vld [vmem:[#allocation2 + $0x30] sm:$0xf]
    %v176 = vld [vmem:[#allocation2 + $0x34] sm:$0xf]
    %v177 = vld [vmem:[#allocation2 + $0x38] sm:$0xf]
    %v178 = vld [vmem:[#allocation2 + $0x3c] sm:$0xf]
    %v195 = vunpack.c.l.b16 %v163
    %v196 = vunpack.c.l.b16 %v164
    %v197 = vunpack.c.l.b16 %v165
    %v198 = vunpack.c.l.b16 %v166
    %v199 = vunpack.c.l.b16 %v167
    %v200 = vunpack.c.l.b16 %v168
    %v201 = vunpack.c.l.b16 %v169
    %v202 = vunpack.c.l.b16 %v170
    %v203 = vunpack.c.l.b16 %v171
    %v204 = vunpack.c.l.b16 %v172
    %v205 = vunpack.c.l.b16 %v173
    %v206 = vunpack.c.l.b16 %v174
    %v207 = vunpack.c.l.b16 %v175
    %v208 = vunpack.c.l.b16 %v176
    %v209 = vunpack.c.l.b16 %v177
    %v210 = vunpack.c.l.b16 %v178
    %v211 = vpack.c.b16 %v196, %v195
    %v212 = vpack.c.b16 %v198, %v197
    %v213 = vpack.c.b16 %v200, %v199
    %v214 = vpack.c.b16 %v202, %v201
    %v215 = vpack.c.b16 %v204, %v203
    %v216 = vpack.c.b16 %v206, %v205
    %v217 = vpack.c.b16 %v208, %v207
    %v218 = vpack.c.b16 %v210, %v209
    %227 = vmatpush.bf16.msra.mxu0 %v218
    %228 = vmatpush.bf16.msra.mxu0 %v217
    %229 = vmatpush.bf16.msra.mxu0 %v216
    %230 = vmatpush.bf16.msra.mxu0 %v215
    %231 = vmatpush.bf16.msra.mxu0 %v214
    %232 = vmatpush.bf16.msra.mxu0 %v213
    %233 = vmatpush.bf16.msra.mxu0 %v212
    %234 = vmatpush.bf16.msra.mxu0 %v211
    %235 = vmatmul.bf16.gmra.mxu0 %v162
    %v236 = vpop.f32.mrf.mxu0
    %v237 = vadd.f32 0.0, %v236
    %v238 = vpop.f32.mrf.mxu0
    %v239 = vadd.f32 0.0, %v238
    %240 = vdwg.mxu0
    %vm241 = vcmask 7168
    %v242 = vsel %vm241, %v42, 0.0
    %v243 = vsel %vm241, %v43, 0.0
    %v244 = vadd.f32 %v242, %v243
    %245 = vadd.xlane.f32.xlu0 %v244
    %v246 = vpop.xlane.xlu0 %245
    %v247 = vrot.slane %v246, 4
    %v248 = vadd.f32 %v246, %v247
    %v249 = vrot.slane %v248, 2
    %v250 = vadd.f32 %v248, %v249
    %v251 = vrot.slane %v250, 1
    %v252 = vadd.f32 %v250, %v251
    %s253 = vtos %v252
    %v254 = vstv %s253
    %v255 = vrcp.pop %v254
    %v256 = vmul.f32 %v254, %v255
    %v257 = vsub.f32 1.0, %v256
    %v258 = vmul.f32 %v255, %v257
    %v259 = vadd.f32 %v255, %v258
    %vm260 = vweird.f32 %v254
    %vm261 = vweird.f32 %v255
    %vm262 = vmor %vm260, %vm261
    %v263 = vsel %vm262, %v255, %v259
    %v264 = vand.u32 2147483647, %v254
    %vm265 = vcmp.eq.f32.partialorder %v264, 8.507059e+37
    %v266 = vand.u32 %v254, 2147483648
    %v267 = vor.u32 1.1754944e-38, %v266
    %v268 = vsel %vm265, %v267, %v263
    %v269 = vmul.f32 1.0, %v268
    %v270 = vld [vmem:[#allocation2 + $0x40] sm:$0xf]
    %v271 = vld [vmem:[#allocation2 + $0x44] sm:$0xf]
    %v274 = vunpack.c.l.b16 %v270
    %v275 = vunpack.c.l.b16 %v271
    %v276 = vpack.c.b16 %v275, %v274
    %vm278 = vcmask 130048
    %v280 = vsel %vm278, %v127, 0
    %282 = vmatpush.bf16.msra.mxu0 0
    %283 = vmatpush.bf16.msra.mxu0 0
    %284 = vmatpush.bf16.msra.mxu0 0
    %285 = vmatpush.bf16.msra.mxu0 0
    %286 = vmatpush.bf16.msra.mxu0 0
    %287 = vmatpush.bf16.msra.mxu0 0
    %288 = vmatpush.bf16.msra.mxu0 0
    %289 = vmatpush.bf16.msra.mxu0 %v276
    %290 = vmatmul.bf16.gmra.mxu0 %v280
    %v291 = vpop.f32.mrf.mxu0
    %v292 = vadd.f32 0.0, %v291
    %v293 = vpop.f32.mrf.mxu0
    %v294 = vadd.f32 0.0, %v293
    %295 = vdwg.mxu0
    %v296 = vpack.c.bf16 %v239, %v237
    %v298 = vsel %vm278, %v80, 0
    %300 = vmatpush.bf16.msra.mxu0 0
    %301 = vmatpush.bf16.msra.mxu0 0
    %302 = vmatpush.bf16.msra.mxu0 0
    %303 = vmatpush.bf16.msra.mxu0 0
    %304 = vmatpush.bf16.msra.mxu0 0
    %305 = vmatpush.bf16.msra.mxu0 0
    %306 = vmatpush.bf16.msra.mxu0 0
    %307 = vmatpush.bf16.msra.mxu0 %v296
    %308 = vmatmul.bf16.gmra.mxu0 %v298
    %v309 = vpop.f32.mrf.mxu0
    %v310 = vadd.f32 %v237, %v309
    %v311 = vpop.f32.mrf.mxu0
    %v312 = vadd.f32 %v239, %v311
    %313 = vdwg.mxu0
    %v314 = vadd.f32 %v310, %v292
    %v315 = vadd.f32 %v312, %v294
    %v316 = vpack.c.bf16 %v315, %v314
    %v317 = vld [vmem:[#allocation2 + $0x48] sm:$0xf]
    %v318 = vld [vmem:[#allocation2 + $0x4c] sm:$0xf]
    %v319 = vld [vmem:[#allocation2 + $0x50] sm:$0xf]
    %v320 = vld [vmem:[#allocation2 + $0x54] sm:$0xf]
    %v321 = vld [vmem:[#allocation2 + $0x58] sm:$0xf]
    %v322 = vld [vmem:[#allocation2 + $0x5c] sm:$0xf]
    %v323 = vld [vmem:[#allocation2 + $0x60] sm:$0xf]
    %v324 = vld [vmem:[#allocation2 + $0x64] sm:$0xf]
    %v325 = vld [vmem:[#allocation2 + $0x68] sm:$0xf]
    %v326 = vld [vmem:[#allocation2 + $0x6c] sm:$0xf]
    %v327 = vld [vmem:[#allocation2 + $0x70] sm:$0xf]
    %v328 = vld [vmem:[#allocation2 + $0x74] sm:$0xf]
    %v329 = vld [vmem:[#allocation2 + $0x78] sm:$0xf]
    %v330 = vld [vmem:[#allocation2 + $0x7c] sm:$0xf]
    %v331 = vld [vmem:[#allocation2 + $0x80] sm:$0xf]
    %v332 = vld [vmem:[#allocation2 + $0x84] sm:$0xf]
    %v333 = vld [vmem:[%s3] sm:$0x1]
    %v334 = vperm.slane %v333, 0
    %v351 = vunpack.c.l.b16 %v317
    %v352 = vunpack.c.l.b16 %v318
    %v353 = vunpack.c.l.b16 %v319
    %v354 = vunpack.c.l.b16 %v320
    %v355 = vunpack.c.l.b16 %v321
    %v356 = vunpack.c.l.b16 %v322
    %v357 = vunpack.c.l.b16 %v323
    %v358 = vunpack.c.l.b16 %v324
    %v359 = vunpack.c.l.b16 %v325
    %v360 = vunpack.c.l.b16 %v326
    %v361 = vunpack.c.l.b16 %v327
    %v362 = vunpack.c.l.b16 %v328
    %v363 = vunpack.c.l.b16 %v329
    %v364 = vunpack.c.l.b16 %v330
    %v365 = vunpack.c.l.b16 %v331
    %v366 = vunpack.c.l.b16 %v332
    %v367 = vpack.c.b16 %v352, %v351
    %v368 = vpack.c.b16 %v354, %v353
    %v369 = vpack.c.b16 %v356, %v355
    %v370 = vpack.c.b16 %v358, %v357
    %v371 = vpack.c.b16 %v360, %v359
    %v372 = vpack.c.b16 %v362, %v361
    %v373 = vpack.c.b16 %v364, %v363
    %v374 = vpack.c.b16 %v366, %v365
    %383 = vmatpush.bf16.msra.mxu0 %v374
    %384 = vmatpush.bf16.msra.mxu0 %v373
    %385 = vmatpush.bf16.msra.mxu0 %v372
    %386 = vmatpush.bf16.msra.mxu0 %v371
    %387 = vmatpush.bf16.msra.mxu0 %v370
    %388 = vmatpush.bf16.msra.mxu0 %v369
    %389 = vmatpush.bf16.msra.mxu0 %v368
    %390 = vmatpush.bf16.msra.mxu0 %v367
    %391 = vmatmul.bf16.gmra.mxu0 %v316
    %v392 = vpop.f32.mrf.mxu0
    %v393 = vadd.f32 %v334, %v392
    %v394 = vpop.f32.mrf.mxu0
    %v395 = vadd.f32 %v334, %v394
    %396 = vdwg.mxu0
    %v397 = vmax.f32 %v393, 0.0
    %v398 = vmax.f32 %v395, 0.0
    %v399 = vpack.c.bf16 %v398, %v397
    %v400 = vld [vmem:[#allocation2 + $0x88] sm:$0xf]
    %v401 = vld [vmem:[#allocation2 + $0x8c] sm:$0xf]
    %v402 = vld [vmem:[#allocation2 + $0x90] sm:$0xf]
    %v403 = vld [vmem:[#allocation2 + $0x94] sm:$0xf]
    %v404 = vld [vmem:[#allocation2 + $0x98] sm:$0xf]
    %v405 = vld [vmem:[#allocation2 + $0x9c] sm:$0xf]
    %v406 = vld [vmem:[#allocation2 + $0xa0] sm:$0xf]
    %v407 = vld [vmem:[#allocation2 + $0xa4] sm:$0xf]
    %v408 = vld [vmem:[#allocation2 + $0xa8] sm:$0xf]
    %v409 = vld [vmem:[#allocation2 + $0xac] sm:$0xf]
    %v410 = vld [vmem:[#allocation2 + $0xb0] sm:$0xf]
    %v411 = vld [vmem:[#allocation2 + $0xb4] sm:$0xf]
    %v412 = vld [vmem:[#allocation2 + $0xb8] sm:$0xf]
    %v413 = vld [vmem:[#allocation2 + $0xbc] sm:$0xf]
    %v414 = vld [vmem:[#allocation2 + $0xc0] sm:$0xf]
    %v415 = vld [vmem:[#allocation2 + $0xc4] sm:$0xf]
    %v416 = vld [vmem:[%s3 + $0x1] sm:$0x1]
    %v417 = vperm.slane %v416, 0
    %v434 = vunpack.c.l.b16 %v400
    %v435 = vunpack.c.l.b16 %v401
    %v436 = vunpack.c.l.b16 %v402
    %v437 = vunpack.c.l.b16 %v403
    %v438 = vunpack.c.l.b16 %v404
    %v439 = vunpack.c.l.b16 %v405
    %v440 = vunpack.c.l.b16 %v406
    %v441 = vunpack.c.l.b16 %v407
    %v442 = vunpack.c.l.b16 %v408
    %v443 = vunpack.c.l.b16 %v409
    %v444 = vunpack.c.l.b16 %v410
    %v445 = vunpack.c.l.b16 %v411
    %v446 = vunpack.c.l.b16 %v412
    %v447 = vunpack.c.l.b16 %v413
    %v448 = vunpack.c.l.b16 %v414
    %v449 = vunpack.c.l.b16 %v415
    %v450 = vpack.c.b16 %v435, %v434
    %v451 = vpack.c.b16 %v437, %v436
    %v452 = vpack.c.b16 %v439, %v438
    %v453 = vpack.c.b16 %v441, %v440
    %v454 = vpack.c.b16 %v443, %v442
    %v455 = vpack.c.b16 %v445, %v444
    %v456 = vpack.c.b16 %v447, %v446
    %v457 = vpack.c.b16 %v449, %v448
    %466 = vmatpush.bf16.msra.mxu0 %v457
    %467 = vmatpush.bf16.msra.mxu0 %v456
    %468 = vmatpush.bf16.msra.mxu0 %v455
    %469 = vmatpush.bf16.msra.mxu0 %v454
    %470 = vmatpush.bf16.msra.mxu0 %v453
    %471 = vmatpush.bf16.msra.mxu0 %v452
    %472 = vmatpush.bf16.msra.mxu0 %v451
    %473 = vmatpush.bf16.msra.mxu0 %v450
    %474 = vmatmul.bf16.gmra.mxu0 %v399
    %v475 = vpop.f32.mrf.mxu0
    %v476 = vadd.f32 %v417, %v475
    %v477 = vpop.f32.mrf.mxu0
    %v478 = vadd.f32 %v417, %v477
    %479 = vdwg.mxu0
    %v480 = vmul.f32 %v476, %v104
    %v481 = vmul.f32 %v478, %v109
    %v482 = vadd.f32 %v480, %v481
    %v483 = vrot.slane %v482, 4
    %v484 = vadd.f32 %v482, %v483
    %v485 = vrot.slane %v484, 2
    %v486 = vadd.f32 %v484, %v485
    %v487 = vrot.slane %v486, 1
    %v488 = vadd.f32 %v486, %v487
    %v489 = vmul.f32 %v488, %v269
    %v490 = vsub.f32 %v476, %v489
    %v491 = vsub.f32 %v478, %v489
    %v492 = vmul.f32 %v490, %v104
    %v493 = vmul.f32 %v491, %v109
    %v494 = vmul.f32 %v492, %v492
    %v495 = vmul.f32 %v493, %v493
    %v496 = vadd.f32 %v494, %v495
    %v497 = vrot.slane %v496, 4
    %v498 = vadd.f32 %v496, %v497
    %v499 = vrot.slane %v498, 2
    %v500 = vadd.f32 %v498, %v499
    %v501 = vrot.slane %v500, 1
    %v502 = vadd.f32 %v500, %v501
    %v503 = vmul.f32 %v502, %v269
    %v504 = vld [vmem:[%s3 + $0x2] sm:$0x1]
    %v505 = vadd.f32 %v503, 1e-05
    %v506 = vrsqrt.pop %v505
    %v507 = vmul.f32 %v506, %v505
    %v508 = vmul.f32 %v507, %v506
    %v509 = vmul.f32 0.5, %v508
    %v510 = vsub.f32 1.5, %v509
    %v511 = vmul.f32 %v506, %v510
    %vm512 = vweird.f32 %v505
    %vm513 = vweird.f32 %v506
    %vm514 = vmor %vm512, %vm513
    %v515 = vsel %vm514, %v506, %v511
    %v516 = vmul.f32 %v504, %v515
    %v517 = vld [vmem:[%s3 + $0x3] sm:$0x1]
    %v518 = vmul.f32 %v489, %v516
    %v519 = vsub.f32 %v517, %v518
    %v520 = vperm.slane %v516, 0
    %v521 = vmul.f32 %v476, %v520
    %v522 = vmul.f32 %v478, %v520
    %v523 = vperm.slane %v519, 0
    %v524 = vadd.f32 %v521, %v523
    %v525 = vadd.f32 %v522, %v523
    %v526 = vmax.f32 %v524, 0.0
    %v527 = vmax.f32 %v525, 0.0
    %v528 = vmul.f32 %v526, %v104
    %v529 = vmul.f32 %v527, %v109
    %v530 = vld [vmem:[#allocation2 + $0xc8] sm:$0xf]
    %v531 = vld [vmem:[#allocation2 + $0xcc] sm:$0xf]
    %v534 = vunpack.c.l.b16 %v530
    %v535 = vunpack.c.l.b16 %v531
    %v536 = vpack.c.b16 %v535, %v534
    %538 = vmatpush.bf16.msra.mxu0 0
    %539 = vmatpush.bf16.msra.mxu0 0
    %540 = vmatpush.bf16.msra.mxu0 0
    %541 = vmatpush.bf16.msra.mxu0 0
    %542 = vmatpush.bf16.msra.mxu0 0
    %543 = vmatpush.bf16.msra.mxu0 0
    %544 = vmatpush.bf16.msra.mxu0 0
    %545 = vmatpush.bf16.msra.mxu0 %v536
    %546 = vmatmul.bf16.gmra.mxu0 %v280
    %v547 = vpop.f32.mrf.mxu0
    %v548 = vadd.f32 0.0, %v547
    %v549 = vpop.f32.mrf.mxu0
    %v550 = vadd.f32 0.0, %v549
    %551 = vdwg.mxu0
    %v552 = vpack.c.bf16 %v529, %v528
    %553 = vmatpush.bf16.msra.mxu0 0
    %554 = vmatpush.bf16.msra.mxu0 0
    %555 = vmatpush.bf16.msra.mxu0 0
    %556 = vmatpush.bf16.msra.mxu0 0
    %557 = vmatpush.bf16.msra.mxu0 0
    %558 = vmatpush.bf16.msra.mxu0 0
    %559 = vmatpush.bf16.msra.mxu0 0
    %560 = vmatpush.bf16.msra.mxu0 %v552
    %561 = vmatmul.bf16.gmra.mxu0 %v298
    %v562 = vpop.f32.mrf.mxu0
    %v563 = vadd.f32 %v528, %v562
    %v564 = vpop.f32.mrf.mxu0
    %v565 = vadd.f32 %v529, %v564
    %566 = vdwg.mxu0
    %v567 = vadd.f32 %v563, %v548
    %v568 = vadd.f32 %v565, %v550
    %v569 = vpack.c.bf16 %v568, %v567
    %v570 = vld [vmem:[#allocation2 + $0xd0] sm:$0xf]
    %v571 = vld [vmem:[#allocation2 + $0xd4] sm:$0xf]
    %v572 = vld [vmem:[#allocation2 + $0xd8] sm:$0xf]
    %v573 = vld [vmem:[#allocation2 + $0xdc] sm:$0xf]
    %v574 = vld [vmem:[#allocation2 + $0xe0] sm:$0xf]
    %v575 = vld [vmem:[#allocation2 + $0xe4] sm:$0xf]
    %v576 = vld [vmem:[#allocation2 + $0xe8] sm:$0xf]
    %v577 = vld [vmem:[#allocation2 + $0xec] sm:$0xf]
    %v578 = vld [vmem:[#allocation2 + $0xf0] sm:$0xf]
    %v579 = vld [vmem:[#allocation2 + $0xf4] sm:$0xf]
    %v580 = vld [vmem:[#allocation2 + $0xf8] sm:$0xf]
    %v581 = vld [vmem:[#allocation2 + $0xfc] sm:$0xf]
    %v582 = vld [vmem:[#allocation2 + $0x100] sm:$0xf]
    %v583 = vld [vmem:[#allocation2 + $0x104] sm:$0xf]
    %v584 = vld [vmem:[#allocation2 + $0x108] sm:$0xf]
    %v585 = vld [vmem:[#allocation2 + $0x10c] sm:$0xf]
    %v586 = vld [vmem:[%s3 + $0x4] sm:$0x1]
    %v587 = vperm.slane %v586, 0
    %v604 = vunpack.c.l.b16 %v570
    %v605 = vunpack.c.l.b16 %v571
    %v606 = vunpack.c.l.b16 %v572
    %v607 = vunpack.c.l.b16 %v573
    %v608 = vunpack.c.l.b16 %v574
    %v609 = vunpack.c.l.b16 %v575
    %v610 = vunpack.c.l.b16 %v576
    %v611 = vunpack.c.l.b16 %v577
    %v612 = vunpack.c.l.b16 %v578
    %v613 = vunpack.c.l.b16 %v579
    %v614 = vunpack.c.l.b16 %v580
    %v615 = vunpack.c.l.b16 %v581
    %v616 = vunpack.c.l.b16 %v582
    %v617 = vunpack.c.l.b16 %v583
    %v618 = vunpack.c.l.b16 %v584
    %v619 = vunpack.c.l.b16 %v585
    %v620 = vpack.c.b16 %v605, %v604
    %v621 = vpack.c.b16 %v607, %v606
    %v622 = vpack.c.b16 %v609, %v608
    %v623 = vpack.c.b16 %v611, %v610
    %v624 = vpack.c.b16 %v613, %v612
    %v625 = vpack.c.b16 %v615, %v614
    %v626 = vpack.c.b16 %v617, %v616
    %v627 = vpack.c.b16 %v619, %v618
    %636 = vmatpush.bf16.msra.mxu0 %v627
    %637 = vmatpush.bf16.msra.mxu0 %v626
    %638 = vmatpush.bf16.msra.mxu0 %v625
    %639 = vmatpush.bf16.msra.mxu0 %v624
    %640 = vmatpush.bf16.msra.mxu0 %v623
    %641 = vmatpush.bf16.msra.mxu0 %v622
    %642 = vmatpush.bf16.msra.mxu0 %v621
    %643 = vmatpush.bf16.msra.mxu0 %v620
    %644 = vmatmul.bf16.gmra.mxu0 %v569
    %v645 = vpop.f32.mrf.mxu0
    %v646 = vadd.f32 %v587, %v645
    %v647 = vpop.f32.mrf.mxu0
    %v648 = vadd.f32 %v587, %v647
    %649 = vdwg.mxu0
    %v650 = vmax.f32 %v646, 0.0
    %v651 = vmax.f32 %v648, 0.0
    %v652 = vpack.c.bf16 %v651, %v650
    %v653 = vld [vmem:[#allocation2 + $0x110] sm:$0xf]
    %v654 = vld [vmem:[#allocation2 + $0x114] sm:$0xf]
    %v655 = vld [vmem:[#allocation2 + $0x118] sm:$0xf]
    %v656 = vld [vmem:[#allocation2 + $0x11c] sm:$0xf]
    %v657 = vld [vmem:[#allocation2 + $0x120] sm:$0xf]
    %v658 = vld [vmem:[#allocation2 + $0x124] sm:$0xf]
    %v659 = vld [vmem:[#allocation2 + $0x128] sm:$0xf]
    %v660 = vld [vmem:[#allocation2 + $0x12c] sm:$0xf]
    %v661 = vld [vmem:[#allocation2 + $0x130] sm:$0xf]
    %v662 = vld [vmem:[#allocation2 + $0x134] sm:$0xf]
    %v663 = vld [vmem:[#allocation2 + $0x138] sm:$0xf]
    %v664 = vld [vmem:[#allocation2 + $0x13c] sm:$0xf]
    %v665 = vld [vmem:[#allocation2 + $0x140] sm:$0xf]
    %v666 = vld [vmem:[#allocation2 + $0x144] sm:$0xf]
    %v667 = vld [vmem:[#allocation2 + $0x148] sm:$0xf]
    %v668 = vld [vmem:[#allocation2 + $0x14c] sm:$0xf]
    %v669 = vld [vmem:[%s3 + $0x5] sm:$0x1]
    %v670 = vperm.slane %v669, 0
    %v687 = vunpack.c.l.b16 %v653
    %v688 = vunpack.c.l.b16 %v654
    %v689 = vunpack.c.l.b16 %v655
    %v690 = vunpack.c.l.b16 %v656
    %v691 = vunpack.c.l.b16 %v657
    %v692 = vunpack.c.l.b16 %v658
    %v693 = vunpack.c.l.b16 %v659
    %v694 = vunpack.c.l.b16 %v660
    %v695 = vunpack.c.l.b16 %v661
    %v696 = vunpack.c.l.b16 %v662
    %v697 = vunpack.c.l.b16 %v663
    %v698 = vunpack.c.l.b16 %v664
    %v699 = vunpack.c.l.b16 %v665
    %v700 = vunpack.c.l.b16 %v666
    %v701 = vunpack.c.l.b16 %v667
    %v702 = vunpack.c.l.b16 %v668
    %v703 = vpack.c.b16 %v688, %v687
    %v704 = vpack.c.b16 %v690, %v689
    %v705 = vpack.c.b16 %v692, %v691
    %v706 = vpack.c.b16 %v694, %v693
    %v707 = vpack.c.b16 %v696, %v695
    %v708 = vpack.c.b16 %v698, %v697
    %v709 = vpack.c.b16 %v700, %v699
    %v710 = vpack.c.b16 %v702, %v701
    %719 = vmatpush.bf16.msra.mxu0 %v710
    %720 = vmatpush.bf16.msra.mxu0 %v709
    %721 = vmatpush.bf16.msra.mxu0 %v708
    %722 = vmatpush.bf16.msra.mxu0 %v707
    %723 = vmatpush.bf16.msra.mxu0 %v706
    %724 = vmatpush.bf16.msra.mxu0 %v705
    %725 = vmatpush.bf16.msra.mxu0 %v704
    %726 = vmatpush.bf16.msra.mxu0 %v703
    %727 = vmatmul.bf16.gmra.mxu0 %v652
    %v728 = vpop.f32.mrf.mxu0
    %v729 = vadd.f32 %v670, %v728
    %v730 = vpop.f32.mrf.mxu0
    %v731 = vadd.f32 %v670, %v730
    %732 = vdwg.mxu0
    %v733 = vmul.f32 %v729, %v104
    %v734 = vmul.f32 %v731, %v109
    %v735 = vadd.f32 %v733, %v734
    %v736 = vrot.slane %v735, 4
    %v737 = vadd.f32 %v735, %v736
    %v738 = vrot.slane %v737, 2
    %v739 = vadd.f32 %v737, %v738
    %v740 = vrot.slane %v739, 1
    %v741 = vadd.f32 %v739, %v740
    %v742 = vmul.f32 %v741, %v269
    %v743 = vsub.f32 %v729, %v742
    %v744 = vsub.f32 %v731, %v742
    %v745 = vmul.f32 %v743, %v104
    %v746 = vmul.f32 %v744, %v109
    %v747 = vmul.f32 %v745, %v745
    %v748 = vmul.f32 %v746, %v746
    %v749 = vadd.f32 %v747, %v748
    %v750 = vrot.slane %v749, 4
    %v751 = vadd.f32 %v749, %v750
    %v752 = vrot.slane %v751, 2
    %v753 = vadd.f32 %v751, %v752
    %v754 = vrot.slane %v753, 1
    %v755 = vadd.f32 %v753, %v754
    %v756 = vmul.f32 %v755, %v269
    %v757 = vld [vmem:[%s3 + $0x6] sm:$0x1]
    %v758 = vadd.f32 %v756, 1e-05
    %v759 = vrsqrt.pop %v758
    %v760 = vmul.f32 %v759, %v758
    %v761 = vmul.f32 %v760, %v759
    %v762 = vmul.f32 0.5, %v761
    %v763 = vsub.f32 1.5, %v762
    %v764 = vmul.f32 %v759, %v763
    %vm765 = vweird.f32 %v758
    %vm766 = vweird.f32 %v759
    %vm767 = vmor %vm765, %vm766
    %v768 = vsel %vm767, %v759, %v764
    %v769 = vmul.f32 %v757, %v768
    %v770 = vld [vmem:[%s3 + $0x7] sm:$0x1]
    %v771 = vmul.f32 %v742, %v769
    %v772 = vsub.f32 %v770, %v771
    %v773 = vperm.slane %v769, 0
    %v774 = vmul.f32 %v729, %v773
    %v775 = vmul.f32 %v731, %v773
    %v776 = vperm.slane %v772, 0
    %v777 = vadd.f32 %v774, %v776
    %v778 = vadd.f32 %v775, %v776
    %v779 = vmax.f32 %v777, 0.0
    %v780 = vmax.f32 %v778, 0.0
    %v781 = vmul.f32 %v779, %v104
    %v782 = vmul.f32 %v780, %v109
    %v783 = vpack.c.bf16 %v782, %v781
    %v784 = vld [vmem:[#allocation2 + $0x150] sm:$0xf]
    %v785 = vld [vmem:[#allocation2 + $0x154] sm:$0xf]
    %v786 = vld [vmem:[#allocation2 + $0x158] sm:$0xf]
    %v787 = vld [vmem:[#allocation2 + $0x15c] sm:$0xf]
    %v788 = vld [vmem:[#allocation2 + $0x160] sm:$0xf]
    %v789 = vld [vmem:[#allocation2 + $0x164] sm:$0xf]
    %v790 = vld [vmem:[#allocation2 + $0x168] sm:$0xf]
    %v791 = vld [vmem:[#allocation2 + $0x16c] sm:$0xf]
    %v792 = vld [vmem:[#allocation2 + $0x170] sm:$0xf]
    %v793 = vld [vmem:[#allocation2 + $0x174] sm:$0xf]
    %v794 = vld [vmem:[#allocation2 + $0x178] sm:$0xf]
    %v795 = vld [vmem:[#allocation2 + $0x17c] sm:$0xf]
    %v796 = vld [vmem:[#allocation2 + $0x180] sm:$0xf]
    %v797 = vld [vmem:[#allocation2 + $0x184] sm:$0xf]
    %v798 = vld [vmem:[#allocation2 + $0x188] sm:$0xf]
    %v799 = vld [vmem:[#allocation2 + $0x18c] sm:$0xf]
    %v800 = vld [vmem:[%s3 + $0x8] sm:$0x1]
    %v801 = vperm.slane %v800, 0
    %v818 = vunpack.c.l.b16 %v784
    %v819 = vunpack.c.l.b16 %v785
    %v820 = vunpack.c.l.b16 %v786
    %v821 = vunpack.c.l.b16 %v787
    %v822 = vunpack.c.l.b16 %v788
    %v823 = vunpack.c.l.b16 %v789
    %v824 = vunpack.c.l.b16 %v790
    %v825 = vunpack.c.l.b16 %v791
    %v826 = vunpack.c.l.b16 %v792
    %v827 = vunpack.c.l.b16 %v793
    %v828 = vunpack.c.l.b16 %v794
    %v829 = vunpack.c.l.b16 %v795
    %v830 = vunpack.c.l.b16 %v796
    %v831 = vunpack.c.l.b16 %v797
    %v832 = vunpack.c.l.b16 %v798
    %v833 = vunpack.c.l.b16 %v799
    %v834 = vpack.c.b16 %v819, %v818
    %v835 = vpack.c.b16 %v821, %v820
    %v836 = vpack.c.b16 %v823, %v822
    %v837 = vpack.c.b16 %v825, %v824
    %v838 = vpack.c.b16 %v827, %v826
    %v839 = vpack.c.b16 %v829, %v828
    %v840 = vpack.c.b16 %v831, %v830
    %v841 = vpack.c.b16 %v833, %v832
    %850 = vmatpush.bf16.msra.mxu0 %v841
    %851 = vmatpush.bf16.msra.mxu0 %v840
    %852 = vmatpush.bf16.msra.mxu0 %v839
    %853 = vmatpush.bf16.msra.mxu0 %v838
    %854 = vmatpush.bf16.msra.mxu0 %v837
    %855 = vmatpush.bf16.msra.mxu0 %v836
    %856 = vmatpush.bf16.msra.mxu0 %v835
    %857 = vmatpush.bf16.msra.mxu0 %v834
    %858 = vmatmul.bf16.gmra.mxu0 %v783
    %v859 = vpop.f32.mrf.mxu0
    %v860 = vadd.f32 %v801, %v859
    %v861 = vpop.f32.mrf.mxu0
    %v862 = vadd.f32 %v801, %v861
    %863 = vdwg.mxu0
    %v864 = vperm.slane %v36, 4
    %vm865 = vcmp.eq.s32.totalorder %v45, %v864
    %v866 = vsel %vm865, 1.0, 0.0
    %v867 = vpack.c.bf16 %v866, %v866
    %v868 = vunpack.c.l.bf16 %v867
    %v869 = vsel %vm278, %v868, 0.0
    %870 = vadd.xlane.f32.xlu0 %v869
    %v871 = vpop.xlane.xlu0 %870
    %v872 = vpack.c.bf16 %v862, %v860
    %v874 = vsel %vm278, %v867, 0
    %876 = vmatpush.bf16.msra.mxu0 0
    %877 = vmatpush.bf16.msra.mxu0 0
    %878 = vmatpush.bf16.msra.mxu0 0
    %879 = vmatpush.bf16.msra.mxu0 0
    %880 = vmatpush.bf16.msra.mxu0 0
    %881 = vmatpush.bf16.msra.mxu0 0
    %882 = vmatpush.bf16.msra.mxu0 0
    %883 = vmatpush.bf16.msra.mxu0 %v872
    %884 = vmatmul.bf16.gmra.mxu0 %v874
    %v885 = vpop.f32.mrf.mxu0
    %v886 = vadd.f32 0.0, %v885
    %v887 = vpop.f32.mrf.mxu0
    %888 = vdwg.mxu0
    %v889 = vmax.f32 %v871, 1.0
    %v890 = vrcp.pop %v889
    %v891 = vmul.f32 %v889, %v890
    %v892 = vsub.f32 1.0, %v891
    %v893 = vmul.f32 %v890, %v892
    %v894 = vadd.f32 %v890, %v893
    %vm895 = vweird.f32 %v889
    %vm896 = vweird.f32 %v890
    %vm897 = vmor %vm895, %vm896
    %v898 = vsel %vm897, %v890, %v894
    %v899 = vand.u32 2147483647, %v889
    %vm900 = vcmp.eq.f32.partialorder %v899, 8.507059e+37
    %v901 = vand.u32 %v889, 2147483648
    %v902 = vor.u32 1.1754944e-38, %v901
    %v903 = vsel %vm900, %v902, %v898
    %v904 = vmul.f32 %v886, %v903
    %905 = vst [vmem:[%s4] sm:$0xff] %v904
    %v906 = vpack.c.bf16 %v904, %v904
    %v907 = vld [vmem:[#allocation2 + $0x190] sm:$0xf]
    %v908 = vld [vmem:[#allocation2 + $0x194] sm:$0xf]
    %v909 = vld [vmem:[#allocation2 + $0x198] sm:$0xf]
    %v910 = vld [vmem:[#allocation2 + $0x19c] sm:$0xf]
    %v911 = vld [vmem:[#allocation2 + $0x1a0] sm:$0xf]
    %v912 = vld [vmem:[#allocation2 + $0x1a4] sm:$0xf]
    %v913 = vld [vmem:[#allocation2 + $0x1a8] sm:$0xf]
    %v914 = vld [vmem:[#allocation2 + $0x1ac] sm:$0xf]
    %v915 = vld [vmem:[#allocation2 + $0x1b0] sm:$0xf]
    %v916 = vld [vmem:[#allocation2 + $0x1b4] sm:$0xf]
    %v917 = vld [vmem:[#allocation2 + $0x1b8] sm:$0xf]
    %v918 = vld [vmem:[#allocation2 + $0x1bc] sm:$0xf]
    %v919 = vld [vmem:[#allocation2 + $0x1c0] sm:$0xf]
    %v920 = vld [vmem:[#allocation2 + $0x1c4] sm:$0xf]
    %v921 = vld [vmem:[#allocation2 + $0x1c8] sm:$0xf]
    %v922 = vld [vmem:[#allocation2 + $0x1cc] sm:$0xf]
    %v923 = vld [vmem:[%s3 + $0x9] sm:$0x1]
    %v924 = vperm.slane %v923, 0
    %v941 = vunpack.c.l.b16 %v907
    %v942 = vunpack.c.l.b16 %v908
    %v943 = vunpack.c.l.b16 %v909
    %v944 = vunpack.c.l.b16 %v910
    %v945 = vunpack.c.l.b16 %v911
    %v946 = vunpack.c.l.b16 %v912
    %v947 = vunpack.c.l.b16 %v913
    %v948 = vunpack.c.l.b16 %v914
    %v949 = vunpack.c.l.b16 %v915
    %v950 = vunpack.c.l.b16 %v916
    %v951 = vunpack.c.l.b16 %v917
    %v952 = vunpack.c.l.b16 %v918
    %v953 = vunpack.c.l.b16 %v919
    %v954 = vunpack.c.l.b16 %v920
    %v955 = vunpack.c.l.b16 %v921
    %v956 = vunpack.c.l.b16 %v922
    %v957 = vpack.c.b16 %v942, %v941
    %v958 = vpack.c.b16 %v944, %v943
    %v959 = vpack.c.b16 %v946, %v945
    %v960 = vpack.c.b16 %v948, %v947
    %v961 = vpack.c.b16 %v950, %v949
    %v962 = vpack.c.b16 %v952, %v951
    %v963 = vpack.c.b16 %v954, %v953
    %v964 = vpack.c.b16 %v956, %v955
    %973 = vmatpush.bf16.msra.mxu0 %v964
    %974 = vmatpush.bf16.msra.mxu0 %v963
    %975 = vmatpush.bf16.msra.mxu0 %v962
    %976 = vmatpush.bf16.msra.mxu0 %v961
    %977 = vmatpush.bf16.msra.mxu0 %v960
    %978 = vmatpush.bf16.msra.mxu0 %v959
    %979 = vmatpush.bf16.msra.mxu0 %v958
    %980 = vmatpush.bf16.msra.mxu0 %v957
    %981 = vmatmul.bf16.gmra.mxu0 %v906
    %v982 = vpop.f32.mrf.mxu0
    %v983 = vadd.f32 %v924, %v982
    %v984 = vpop.f32.mrf.mxu0
    %985 = vdwg.mxu0
    %v986 = vmax.f32 %v983, 0.0
    %v987 = vpack.c.bf16 %v986, %v986
    %v988 = vld [vmem:[#allocation2 + $0x1d0] sm:$0xf]
    %v989 = vld [vmem:[#allocation2 + $0x1d4] sm:$0xf]
    %v990 = vld [vmem:[#allocation2 + $0x1d8] sm:$0xf]
    %v991 = vld [vmem:[#allocation2 + $0x1dc] sm:$0xf]
    %v992 = vld [vmem:[#allocation2 + $0x1e0] sm:$0xf]
    %v993 = vld [vmem:[#allocation2 + $0x1e4] sm:$0xf]
    %v994 = vld [vmem:[#allocation2 + $0x1e8] sm:$0xf]
    %v995 = vld [vmem:[#allocation2 + $0x1ec] sm:$0xf]
    %v996 = vld [vmem:[#allocation2 + $0x1f0] sm:$0xf]
    %v997 = vld [vmem:[#allocation2 + $0x1f4] sm:$0xf]
    %v998 = vld [vmem:[#allocation2 + $0x1f8] sm:$0xf]
    %v999 = vld [vmem:[#allocation2 + $0x1fc] sm:$0xf]
    %v1000 = vld [vmem:[#allocation2 + $0x200] sm:$0xf]
    %v1001 = vld [vmem:[#allocation2 + $0x204] sm:$0xf]
    %v1002 = vld [vmem:[#allocation2 + $0x208] sm:$0xf]
    %v1003 = vld [vmem:[#allocation2 + $0x20c] sm:$0xf]
    %v1004 = vld [vmem:[%s3 + $0xa] sm:$0x1]
    %v1005 = vperm.slane %v1004, 0
    %v1022 = vunpack.c.l.b16 %v988
    %v1023 = vunpack.c.l.b16 %v989
    %v1024 = vunpack.c.l.b16 %v990
    %v1025 = vunpack.c.l.b16 %v991
    %v1026 = vunpack.c.l.b16 %v992
    %v1027 = vunpack.c.l.b16 %v993
    %v1028 = vunpack.c.l.b16 %v994
    %v1029 = vunpack.c.l.b16 %v995
    %v1030 = vunpack.c.l.b16 %v996
    %v1031 = vunpack.c.l.b16 %v997
    %v1032 = vunpack.c.l.b16 %v998
    %v1033 = vunpack.c.l.b16 %v999
    %v1034 = vunpack.c.l.b16 %v1000
    %v1035 = vunpack.c.l.b16 %v1001
    %v1036 = vunpack.c.l.b16 %v1002
    %v1037 = vunpack.c.l.b16 %v1003
    %v1038 = vpack.c.b16 %v1023, %v1022
    %v1039 = vpack.c.b16 %v1025, %v1024
    %v1040 = vpack.c.b16 %v1027, %v1026
    %v1041 = vpack.c.b16 %v1029, %v1028
    %v1042 = vpack.c.b16 %v1031, %v1030
    %v1043 = vpack.c.b16 %v1033, %v1032
    %v1044 = vpack.c.b16 %v1035, %v1034
    %v1045 = vpack.c.b16 %v1037, %v1036
    %1054 = vmatpush.bf16.msra.mxu0 %v1045
    %1055 = vmatpush.bf16.msra.mxu0 %v1044
    %1056 = vmatpush.bf16.msra.mxu0 %v1043
    %1057 = vmatpush.bf16.msra.mxu0 %v1042
    %1058 = vmatpush.bf16.msra.mxu0 %v1041
    %1059 = vmatpush.bf16.msra.mxu0 %v1040
    %1060 = vmatpush.bf16.msra.mxu0 %v1039
    %1061 = vmatpush.bf16.msra.mxu0 %v1038
    %1062 = vmatmul.bf16.gmra.mxu0 %v987
    %v1063 = vpop.f32.mrf.mxu0
    %v1064 = vadd.f32 %v1005, %v1063
    %v1065 = vpop.f32.mrf.mxu0
    %1066 = vdwg.mxu0
    %1067 = vst [vmem:[%s5] sm:$0xff] %v1064
    // Predicated region
    $region22: #{gine_forward.1} parent=1 // pred_check
      _
    $region23: #{gine_forward.1} parent=1 // pred_check_branch
      %1069 = sbr.rel (0) target = $region25
    $region24: #{gine_forward.1} parent=1 // pred_region
      _
    $region25: #{gine_forward.1} parent=1 // pred_fallthru
      _
    // Predicated region
    $region26: #{gine_forward.1} parent=1 // pred_check
      _
    $region27: #{gine_forward.1} parent=1 // pred_check_branch
      %1071 = sbr.rel (0) target = $region29
    $region28: #{gine_forward.1} parent=1 // pred_region
      _
    $region29: #{gine_forward.1} parent=1 // pred_fallthru
      _
    // Predicated region
    $region30: #{gine_forward.1} parent=1 // pred_check
      _
    $region31: #{gine_forward.1} parent=1 // pred_check_branch
      %1073 = sbr.rel (0) target = $region33
    $region32: #{gine_forward.1} parent=1 // pred_region
      _
    $region33: #{gine_forward.1} parent=1 // pred_fallthru
      _
    // Predicated region
    $region34: #{gine_forward.1} parent=1 // pred_check
      _
    $region35: #{gine_forward.1} parent=1 // pred_check_branch
      %1075 = sbr.rel (0) target = $region37
    $region36: #{gine_forward.1} parent=1 // pred_region
      _
    $region37: #{gine_forward.1} parent=1 // pred_fallthru
      _
    %1076 = vsyncpa [#allocation3], 1

</llo_original>
